<compile_context>
chip_gen: v6e
topology: v6e:2x2x1
jax: 0.10.0
libtpu: 0.0.40
codegen_flags: <defaults>
</compile_context>

<pallas_src>
import functools

import jax
import jax.numpy as jnp
from jax.experimental import pallas as pl
from jax.experimental.pallas import tpu as pltpu


def _vmem_limit_bytes():
    try:
        cap = int(pltpu.get_tpu_info().vmem_capacity_bytes)
    except Exception:
        cap = 64 * 1024 * 1024
    return max(16 * 1024 * 1024, min(int(cap * 0.70), 96 * 1024 * 1024))


def _silu(y):
    # exp and approx reciprocal both land on the EUP slot.
    return y * pl.reciprocal(1.0 + jnp.exp(-y), approx=True)


# ---------------------------------------------------------------------------
# Fused kernel: cv1 (1x1) + BN + SiLU  ->  pad  ->  cv2 (3x3) + BN + SiLU
#               (+ residual add), one (image, row-tile) block per grid step.
# ---------------------------------------------------------------------------
def _bottleneck_kernel(x_ref, w1_ref, w2_ref, s1_ref, o1_ref, s2_ref, o2_ref,
                       o_ref, y1p_ref, *, TH, H, W, Cm, add, n_tiles):
    f32 = jnp.float32
    bd = y1p_ref.dtype
    i = pl.program_id(1)
    THW = TH * W
    row0 = i * TH

    # ---- cv1 on the TH output rows (this slice is also the residual) -------
    m_start = pl.multiple_of(i * THW, THW)
    xm = x_ref[pl.ds(m_start, THW), :]                        # (THW, C1)
    y1 = jnp.dot(xm, w1_ref[...], preferred_element_type=f32)
    y1 = _silu(y1 * s1_ref[...] + o1_ref[...])
    y1p_ref[1:TH + 1, 1:W + 1, :] = y1.reshape(TH, W, Cm).astype(bd)

    # ---- zero-pad columns (written every step: no cross-step state) --------
    zcol = jnp.zeros((TH + 2, 1, Cm), bd)
    y1p_ref[:, 0:1, :] = zcol
    y1p_ref[:, W + 1:W + 2, :] = zcol

    # ---- halo rows: recompute cv1 on the neighbouring rows, or zero pad ----
    if n_tiles == 1:
        zrow = jnp.zeros((1, W + 2, Cm), bd)
        y1p_ref[0:1, :, :] = zrow
        y1p_ref[TH + 1:TH + 2, :, :] = zrow
    else:
        def halo_row(row_idx, valid):
            xr = x_ref[pl.ds(row_idx * W, W), :]              # (W, C1)
            yr = jnp.dot(xr, w1_ref[...], preferred_element_type=f32)
            yr = _silu(yr * s1_ref[...] + o1_ref[...]) * valid
            return yr.reshape(1, W, Cm).astype(bd)

        top_valid = (i > 0).astype(f32)
        bot_valid = (i < n_tiles - 1).astype(f32)
        y1p_ref[0:1, 1:W + 1, :] = halo_row(jnp.maximum(row0 - 1, 0), top_valid)
        y1p_ref[TH + 1:TH + 2, 1:W + 1, :] = halo_row(
            jnp.minimum(row0 + TH, H - 1), bot_valid)

    # ---- 3x3 conv: dy folded into the contraction (K = 3*Cm) ---------------
    slabs = [y1p_ref[dy:dy + TH, :, :] for dy in range(3)]    # 3 x (TH, W+2, Cm)
    xcat = jnp.concatenate(slabs, axis=-1)                    # (TH, W+2, 3*Cm)
    acc = None
    for dx in range(3):
        patch = xcat[:, dx:dx + W, :].reshape(THW, 3 * Cm)
        term = jnp.dot(patch, w2_ref[dx], preferred_element_type=f32)
        acc = term if acc is None else acc + term

    y2 = _silu(acc * s2_ref[...] + o2_ref[...])
    if add:
        y2 = y2 + xm.astype(f32)
    o_ref[...] = y2.astype(o_ref.dtype)


# ---------------------------------------------------------------------------
# VMEM-budgeted row-tile selection
# ---------------------------------------------------------------------------
def _vmem_estimate(TH, H, W, C1, Cm, C2, isz):
    x_img = H * W * C1 * isz * 2                 # resident image, dbl-buffered
    out_blk = TH * W * C2 * isz * 2              # output block, dbl-buffered
    y1p = (TH + 2) * (W + 2) * Cm * isz          # padded cv1 scratch
    xcat = TH * (W + 2) * 3 * Cm * isz           # dy-stacked operand
    patches = 2 * TH * W * 3 * Cm * isz          # live shifted operands
    acc = TH * W * C2 * 4                        # f32 accumulator
    y1f = TH * W * Cm * 4                        # cv1 f32 intermediate
    wts = (C1 * Cm + 9 * Cm * C2) * isz * 2
    return int(1.2 * (x_img + out_blk + y1p + xcat + patches + acc + y1f + wts))


def _pick_row_tile(H, W, C1, Cm, C2, isz, budget, tile_rows):
    if tile_rows is not None:
        assert H % tile_rows == 0
        assert tile_rows == H or (tile_rows * W) % 8 == 0
        return tile_rows
    cands = [d for d in range(H, 0, -1)
             if H % d == 0 and (d == H or (d * W) % 8 == 0)]
    for th in cands:                             # largest tile that fits
        if _vmem_estimate(th, H, W, C1, Cm, C2, isz) <= budget:
            return th
    return cands[-1]


# ---------------------------------------------------------------------------
# Wrapper: BottleneckBase forward
# ---------------------------------------------------------------------------
def bottleneck_base(x, w1, bn1, w2, bn2, *, shortcut=True, g=1, eps=1e-5,
                    tile_rows=None):
    """x: (N, C1, H, W) NCHW.  w1: (Cm, C1, 1, 1), w2: (C2, Cm, 3, 3) OIHW.

    bn1 / bn2 = (gamma, beta, running_mean, running_var) in eval mode.
    """
    # TODO(synk): grouped 3x3 conv (g > 1) is not implemented in the kernel.
    assert g == 1, "only g == 1 is supported"
    # TODO(synk): very small feature maps could batch several images per grid
    # step (larger MXU M); very large images assume the whole image fits VMEM.

    N, C1, H, W = x.shape
    Cm = w1.shape[0]
    C2 = w2.shape[0]
    add = bool(shortcut) and (C1 == C2)
    dt = x.dtype
    isz = dt.itemsize
    f32 = jnp.float32

    # Fold BN into per-output-channel scale / bias (kept in f32).
    g1, b1, m1, v1 = (a.astype(f32) for a in bn1)
    g2, b2, m2, v2 = (a.astype(f32) for a in bn2)
    s1 = g1 / jnp.sqrt(v1 + eps)
    o1 = b1 - m1 * s1
    s2 = g2 / jnp.sqrt(v2 + eps)
    o2 = b2 - m2 * s2

    # NHWC with flattened rows: channels on lanes, (h, w) on sublanes.
    x3 = jnp.transpose(x, (0, 2, 3, 1)).reshape(N, H * W, C1)
    # Weights stay in the activation dtype (fast MXU path); only BN is f32.
    w1m = jnp.transpose(w1.reshape(Cm, C1), (1, 0)).astype(dt)       # (C1, Cm)
    # (dx, dy*Cm + cin, cout): dy folded into the contraction dimension.
    w2c = jnp.transpose(w2, (3, 2, 1, 0)).reshape(3, 3 * Cm, C2).astype(dt)

    vmem_limit = _vmem_limit_bytes()
    TH = _pick_row_tile(H, W, C1, Cm, C2, isz, int(vmem_limit * 0.8), tile_rows)
    n_tiles = H // TH

    kernel = functools.partial(_bottleneck_kernel, TH=TH, H=H, W=W, Cm=Cm,
                               add=add, n_tiles=n_tiles)

    cost = pl.CostEstimate(
        flops=2 * N * H * W * (C1 * Cm + 9 * Cm * C2)
              + 8 * N * H * W * (Cm + C2),
        transcendentals=N * H * W * (Cm + C2),
        bytes_accessed=(N * H * W * (C1 + C2)
                        + C1 * Cm + 9 * Cm * C2) * isz + 2 * (Cm + C2) * 4,
    )

    out3 = pl.pallas_call(
        kernel,
        out_shape=jax.ShapeDtypeStruct((N, H * W, C2), dt),
        grid_spec=pltpu.PrefetchScalarGridSpec(
            num_scalar_prefetch=0,
            grid=(N, n_tiles),
            in_specs=[
                # Whole image resident across the row-tile axis.
                pl.BlockSpec((None, H * W, C1), lambda n, i: (n, 0, 0)),
                pl.BlockSpec((C1, Cm), lambda n, i: (0, 0)),
                pl.BlockSpec((3, 3 * Cm, C2), lambda n, i: (0, 0, 0)),
                pl.BlockSpec((1, Cm), lambda n, i: (0, 0)),
                pl.BlockSpec((1, Cm), lambda n, i: (0, 0)),
                pl.BlockSpec((1, C2), lambda n, i: (0, 0)),
                pl.BlockSpec((1, C2), lambda n, i: (0, 0)),
            ],
            out_specs=pl.BlockSpec((None, TH * W, C2), lambda n, i: (n, i, 0)),
            scratch_shapes=[pltpu.VMEM((TH + 2, W + 2, Cm), dt)],
        ),
        compiler_params=pltpu.CompilerParams(
            dimension_semantics=("parallel", "parallel"),
            vmem_limit_bytes=vmem_limit,
        ),
        cost_estimate=cost,
    )(x3, w1m, w2c, s1.reshape(1, Cm), o1.reshape(1, Cm),
      s2.reshape(1, C2), o2.reshape(1, C2))

    return jnp.transpose(out3.reshape(N, H, W, C2), (0, 3, 1, 2))


# ---------------------------------------------------------------------------
# Pure-JAX reference (matches the PyTorch module in eval mode)
# ---------------------------------------------------------------------------
def _ref_forward(x, w1, bn1, w2, bn2, *, shortcut=True, g=1, eps=1e-5):
    def conv_bn_silu(inp, w, bn, pad, groups):
        gamma, beta, mean, var = bn
        y = jax.lax.conv_general_dilated(
            inp, w, window_strides=(1, 1),
            padding=[(pad, pad), (pad, pad)],
            dimension_numbers=("NCHW", "OIHW", "NCHW"),
            feature_group_count=groups)
        s = gamma / jnp.sqrt(var + eps)
        b = beta - mean * s
        y = y * s[None, :, None, None] + b[None, :, None, None]
        return y * jax.nn.sigmoid(y)

    c1, c2 = x.shape[1], w2.shape[0]
    y = conv_bn_silu(x, w1, bn1, 0, 1)
    y = conv_bn_silu(y, w2, bn2, 1, g)
    return x + y if (shortcut and c1 == c2) else y


if __name__ == "__main__":
    key = jax.random.PRNGKey(0)
    ks = jax.random.split(key, 11)

    # Shapes consistent with BottleneckBase(c1=4, c2=4, e=0.5): c_ = 2.
    N, C1, H, W = 2, 4, 16, 16
    C2 = C1
    Cm = max(1, int(C2 * 0.5))

    x = jax.random.normal(ks[0], (N, C1, H, W), dtype=jnp.float32)
    w1 = 0.5 * jax.random.normal(ks[1], (Cm, C1, 1, 1), dtype=jnp.float32)
    w2 = 0.2 * jax.random.normal(ks[2], (C2, Cm, 3, 3), dtype=jnp.float32)

    def bn_params(kg, kb, km, kv, c):
        gamma = 1.0 + 0.1 * jax.random.normal(kg, (c,), dtype=jnp.float32)
        beta = 0.1 * jax.random.normal(kb, (c,), dtype=jnp.float32)
        mean = 0.1 * jax.random.normal(km, (c,), dtype=jnp.float32)
        var = jax.random.uniform(kv, (c,), dtype=jnp.float32,
                                 minval=0.5, maxval=1.5)
        return (gamma, beta, mean, var)

    bn1 = bn_params(ks[3], ks[4], ks[5], ks[6], Cm)
    bn2 = bn_params(ks[7], ks[8], ks[9], ks[10], C2)

    # Cover: single-tile + residual, multi-tile (halo path) + residual,
    # multi-tile without residual.
    cases = [dict(shortcut=True, tile_rows=None),
             dict(shortcut=True, tile_rows=4),
             dict(shortcut=False, tile_rows=8)]
    for cfg in cases:
        fwd = jax.jit(functools.partial(bottleneck_base, g=1, **cfg))
        y = jax.block_until_ready(fwd(x, w1, bn1, w2, bn2))
        y_ref = _ref_forward(x, w1, bn1, w2, bn2, shortcut=cfg["shortcut"], g=1)
        assert y.shape == x.shape
        err = float(jnp.max(jnp.abs(y - y_ref)))
        assert err < 2e-2, f"{cfg}: max abs error vs reference = {err}"

    print("KERNEL_OK")
</pallas_src>

<mosaic_0001>
module attributes {stable_mosaic.version = 11 : i64} {
  func.func @_bottleneck_kernel(%arg0: i32, %arg1: i32, %arg2: memref<1x256x4xf32, #tpu.memory_space<vmem>>, %arg3: memref<4x2xf32, #tpu.memory_space<vmem>>, %arg4: memref<3x6x4xf32, #tpu.memory_space<vmem>>, %arg5: memref<1x2xf32, #tpu.memory_space<vmem>>, %arg6: memref<1x2xf32, #tpu.memory_space<vmem>>, %arg7: memref<1x4xf32, #tpu.memory_space<vmem>>, %arg8: memref<1x4xf32, #tpu.memory_space<vmem>>, %arg9: memref<1x256x4xf32, #tpu.memory_space<vmem>>, %arg10: memref<18x18x2xf32, #tpu.memory_space<vmem>>) attributes {dimension_semantics = [#tpu.dimension_semantics<parallel>, #tpu.dimension_semantics<parallel>], iteration_bounds = array<i64: 2, 1>, scalar_prefetch = 0 : i64, scratch_operands = 1 : i64, tpu.core_type = #tpu.core_type<tc>, window_params = [{transform_indices = @transform_0, window_bounds = array<i64: 1, 256, 4>}, {pipeline_mode = #tpu.pipeline_mode<synchronous>, transform_indices = @transform_1, window_bounds = array<i64: 4, 2>}, {pipeline_mode = #tpu.pipeline_mode<synchronous>, transform_indices = @transform_2, window_bounds = array<i64: 3, 6, 4>}, {pipeline_mode = #tpu.pipeline_mode<synchronous>, transform_indices = @transform_3, window_bounds = array<i64: 1, 2>}, {pipeline_mode = #tpu.pipeline_mode<synchronous>, transform_indices = @transform_4, window_bounds = array<i64: 1, 2>}, {pipeline_mode = #tpu.pipeline_mode<synchronous>, transform_indices = @transform_5, window_bounds = array<i64: 1, 4>}, {pipeline_mode = #tpu.pipeline_mode<synchronous>, transform_indices = @transform_6, window_bounds = array<i64: 1, 4>}, {transform_indices = @transform_7, window_bounds = array<i64: 1, 256, 4>}]} {
    %c256_i32 = arith.constant 256 : i32
    %0 = arith.muli %arg1, %c256_i32 : i32
    %1 = tpu.assume_multiple %0, 256 : i32
    %c0 = arith.constant 0 : index
    %2 = arith.index_cast %1 : i32 to index
    %c0_0 = arith.constant 0 : index
    %3 = vector.load %arg2[%c0, %2, %c0_0] : memref<1x256x4xf32, #tpu.memory_space<vmem>>, vector<1x256x4xf32>
    %4 = vector.shape_cast %3 : vector<1x256x4xf32> to vector<256x4xf32>
    %c0_1 = arith.constant 0 : index
    %c0_2 = arith.constant 0 : index
    %5 = vector.load %arg3[%c0_1, %c0_2] : memref<4x2xf32, #tpu.memory_space<vmem>>, vector<4x2xf32>
    %cst = arith.constant dense<0.000000e+00> : vector<256x2xf32>
    %6 = tpu.matmul %4, %5, %cst {dimension_numbers = #tpu.dot_dimension_numbers<[1], [0], [0], [1], [0, 0, 1, 1], [], []>} : vector<256x4xf32>, vector<4x2xf32>, vector<256x2xf32> -> vector<256x2xf32>
    %c0_3 = arith.constant 0 : index
    %c0_4 = arith.constant 0 : index
    %7 = vector.load %arg5[%c0_3, %c0_4] : memref<1x2xf32, #tpu.memory_space<vmem>>, vector<1x2xf32>
    %8 = vector.broadcast %7 : vector<1x2xf32> to vector<256x2xf32>
    %9 = arith.mulf %6, %8 : vector<256x2xf32>
    %c0_5 = arith.constant 0 : index
    %c0_6 = arith.constant 0 : index
    %10 = vector.load %arg6[%c0_5, %c0_6] : memref<1x2xf32, #tpu.memory_space<vmem>>, vector<1x2xf32>
    %11 = vector.broadcast %10 : vector<1x2xf32> to vector<256x2xf32>
    %12 = arith.addf %9, %11 : vector<256x2xf32>
    %cst_7 = arith.constant 0.000000e+00 : f32
    %13 = vector.broadcast %cst_7 : f32 to vector<256x2xf32>
    %14 = arith.subf %13, %12 : vector<256x2xf32>
    %15 = math.exp %14 : vector<256x2xf32>
    %cst_8 = arith.constant 1.000000e+00 : f32
    %16 = vector.broadcast %cst_8 : f32 to vector<256x2xf32>
    %17 = arith.addf %16, %15 : vector<256x2xf32>
    %18 = tpu.reciprocal %17 {approx = true} : vector<256x2xf32> -> vector<256x2xf32>
    %19 = arith.mulf %12, %18 : vector<256x2xf32>
    %20 = vector.shape_cast %19 : vector<256x2xf32> to vector<16x16x2xf32>
    %c1 = arith.constant 1 : index
    %c1_9 = arith.constant 1 : index
    %c0_10 = arith.constant 0 : index
    %21 = vector.load %arg10[%c1, %c1_9, %c0_10] : memref<18x18x2xf32, #tpu.memory_space<vmem>>, vector<16x16x2xf32>
    tpu.vector_store %arg10[%c1, %c1_9, %c0_10], %20 {strides = array<i32>} : memref<18x18x2xf32, #tpu.memory_space<vmem>>, vector<16x16x2xf32>,
    %cst_11 = arith.constant 0.000000e+00 : f32
    %22 = vector.broadcast %cst_11 : f32 to vector<18x1x2xf32>
    %c0_12 = arith.constant 0 : index
    %c0_13 = arith.constant 0 : index
    %c0_14 = arith.constant 0 : index
    %23 = vector.load %arg10[%c0_12, %c0_13, %c0_14] : memref<18x18x2xf32, #tpu.memory_space<vmem>>, vector<18x1x2xf32>
    tpu.vector_store %arg10[%c0_12, %c0_13, %c0_14], %22 {strides = array<i32>} : memref<18x18x2xf32, #tpu.memory_space<vmem>>, vector<18x1x2xf32>,
    %c0_15 = arith.constant 0 : index
    %c17 = arith.constant 17 : index
    %c0_16 = arith.constant 0 : index
    %24 = vector.load %arg10[%c0_15, %c17, %c0_16] : memref<18x18x2xf32, #tpu.memory_space<vmem>>, vector<18x1x2xf32>
    tpu.vector_store %arg10[%c0_15, %c17, %c0_16], %22 {strides = array<i32>} : memref<18x18x2xf32, #tpu.memory_space<vmem>>, vector<18x1x2xf32>,
    %cst_17 = arith.constant 0.000000e+00 : f32
    %25 = vector.broadcast %cst_17 : f32 to vector<1x18x2xf32>
    %c0_18 = arith.constant 0 : index
    %c0_19 = arith.constant 0 : index
    %c0_20 = arith.constant 0 : index
    %26 = vector.load %arg10[%c0_18, %c0_19, %c0_20] : memref<18x18x2xf32, #tpu.memory_space<vmem>>, vector<1x18x2xf32>
    tpu.vector_store %arg10[%c0_18, %c0_19, %c0_20], %25 {strides = array<i32>} : memref<18x18x2xf32, #tpu.memory_space<vmem>>, vector<1x18x2xf32>,
    %c17_21 = arith.constant 17 : index
    %c0_22 = arith.constant 0 : index
    %c0_23 = arith.constant 0 : index
    %27 = vector.load %arg10[%c17_21, %c0_22, %c0_23] : memref<18x18x2xf32, #tpu.memory_space<vmem>>, vector<1x18x2xf32>
    tpu.vector_store %arg10[%c17_21, %c0_22, %c0_23], %25 {strides = array<i32>} : memref<18x18x2xf32, #tpu.memory_space<vmem>>, vector<1x18x2xf32>,
    %c0_24 = arith.constant 0 : index
    %c0_25 = arith.constant 0 : index
    %c0_26 = arith.constant 0 : index
    %28 = vector.load %arg10[%c0_24, %c0_25, %c0_26] : memref<18x18x2xf32, #tpu.memory_space<vmem>>, vector<16x18x2xf32>
    %c1_27 = arith.constant 1 : index
    %c0_28 = arith.constant 0 : index
    %c0_29 = arith.constant 0 : index
    %29 = vector.load %arg10[%c1_27, %c0_28, %c0_29] : memref<18x18x2xf32, #tpu.memory_space<vmem>>, vector<16x18x2xf32>
    %c2 = arith.constant 2 : index
    %c0_30 = arith.constant 0 : index
    %c0_31 = arith.constant 0 : index
    %30 = vector.load %arg10[%c2, %c0_30, %c0_31] : memref<18x18x2xf32, #tpu.memory_space<vmem>>, vector<16x18x2xf32>
    %31 = tpu.concatenate %28, %29, %30 in 2 : vector<16x18x2xf32>, vector<16x18x2xf32>, vector<16x18x2xf32> -> vector<16x18x6xf32>
    %32 = vector.extract_strided_slice %31 {offsets = [0, 0, 0], sizes = [16, 16, 6], strides = [1, 1, 1]} : vector<16x18x6xf32> to vector<16x16x6xf32>
    %33 = vector.shape_cast %32 : vector<16x16x6xf32> to vector<256x6xf32>
    %c0_32 = arith.constant 0 : index
    %c0_33 = arith.constant 0 : index
    %c0_34 = arith.constant 0 : index
    %34 = vector.load %arg4[%c0_32, %c0_33, %c0_34] : memref<3x6x4xf32, #tpu.memory_space<vmem>>, vector<1x6x4xf32>
    %35 = vector.shape_cast %34 : vector<1x6x4xf32> to vector<6x4xf32>
    %cst_35 = arith.constant dense<0.000000e+00> : vector<256x4xf32>
    %36 = tpu.matmul %33, %35, %cst_35 {dimension_numbers = #tpu.dot_dimension_numbers<[1], [0], [0], [1], [0, 0, 1, 1], [], []>} : vector<256x6xf32>, vector<6x4xf32>, vector<256x4xf32> -> vector<256x4xf32>
    %37 = vector.extract_strided_slice %31 {offsets = [0, 1, 0], sizes = [16, 16, 6], strides = [1, 1, 1]} : vector<16x18x6xf32> to vector<16x16x6xf32>
    %38 = vector.shape_cast %37 : vector<16x16x6xf32> to vector<256x6xf32>
    %c1_36 = arith.constant 1 : index
    %c0_37 = arith.constant 0 : index
    %c0_38 = arith.constant 0 : index
    %39 = vector.load %arg4[%c1_36, %c0_37, %c0_38] : memref<3x6x4xf32, #tpu.memory_space<vmem>>, vector<1x6x4xf32>
    %40 = vector.shape_cast %39 : vector<1x6x4xf32> to vector<6x4xf32>
    %cst_39 = arith.constant dense<0.000000e+00> : vector<256x4xf32>
    %41 = tpu.matmul %38, %40, %cst_39 {dimension_numbers = #tpu.dot_dimension_numbers<[1], [0], [0], [1], [0, 0, 1, 1], [], []>} : vector<256x6xf32>, vector<6x4xf32>, vector<256x4xf32> -> vector<256x4xf32>
    %42 = arith.addf %36, %41 : vector<256x4xf32>
    %43 = vector.extract_strided_slice %31 {offsets = [0, 2, 0], sizes = [16, 16, 6], strides = [1, 1, 1]} : vector<16x18x6xf32> to vector<16x16x6xf32>
    %44 = vector.shape_cast %43 : vector<16x16x6xf32> to vector<256x6xf32>
    %c2_40 = arith.constant 2 : index
    %c0_41 = arith.constant 0 : index
    %c0_42 = arith.constant 0 : index
    %45 = vector.load %arg4[%c2_40, %c0_41, %c0_42] : memref<3x6x4xf32, #tpu.memory_space<vmem>>, vector<1x6x4xf32>
    %46 = vector.shape_cast %45 : vector<1x6x4xf32> to vector<6x4xf32>
    %cst_43 = arith.constant dense<0.000000e+00> : vector<256x4xf32>
    %47 = tpu.matmul %44, %46, %cst_43 {dimension_numbers = #tpu.dot_dimension_numbers<[1], [0], [0], [1], [0, 0, 1, 1], [], []>} : vector<256x6xf32>, vector<6x4xf32>, vector<256x4xf32> -> vector<256x4xf32>
    %48 = arith.addf %42, %47 : vector<256x4xf32>
    %c0_44 = arith.constant 0 : index
    %c0_45 = arith.constant 0 : index
    %49 = vector.load %arg7[%c0_44, %c0_45] : memref<1x4xf32, #tpu.memory_space<vmem>>, vector<1x4xf32>
    %50 = vector.broadcast %49 : vector<1x4xf32> to vector<256x4xf32>
    %51 = arith.mulf %48, %50 : vector<256x4xf32>
    %c0_46 = arith.constant 0 : index
    %c0_47 = arith.constant 0 : index
    %52 = vector.load %arg8[%c0_46, %c0_47] : memref<1x4xf32, #tpu.memory_space<vmem>>, vector<1x4xf32>
    %53 = vector.broadcast %52 : vector<1x4xf32> to vector<256x4xf32>
    %54 = arith.addf %51, %53 : vector<256x4xf32>
    %cst_48 = arith.constant 0.000000e+00 : f32
    %55 = vector.broadcast %cst_48 : f32 to vector<256x4xf32>
    %56 = arith.subf %55, %54 : vector<256x4xf32>
    %57 = math.exp %56 : vector<256x4xf32>
    %cst_49 = arith.constant 1.000000e+00 : f32
    %58 = vector.broadcast %cst_49 : f32 to vector<256x4xf32>
    %59 = arith.addf %58, %57 : vector<256x4xf32>
    %60 = tpu.reciprocal %59 {approx = true} : vector<256x4xf32> -> vector<256x4xf32>
    %61 = arith.mulf %54, %60 : vector<256x4xf32>
    %62 = arith.addf %61, %4 : vector<256x4xf32>
    %c0_50 = arith.constant 0 : index
    %c0_51 = arith.constant 0 : index
    %c0_52 = arith.constant 0 : index
    %63 = vector.load %arg9[%c0_50, %c0_51, %c0_52] : memref<1x256x4xf32, #tpu.memory_space<vmem>>, vector<1x256x4xf32>
    %64 = vector.shape_cast %63 : vector<1x256x4xf32> to vector<256x4xf32>
    %65 = vector.shape_cast %62 : vector<256x4xf32> to vector<1x256x4xf32>
    tpu.vector_store %arg9[%c0_50, %c0_51, %c0_52], %65 {strides = array<i32>} : memref<1x256x4xf32, #tpu.memory_space<vmem>>, vector<1x256x4xf32>,
    return
  }
  func.func @transform_0(%arg0: i32, %arg1: i32) -> (i32, i32, i32) {
    %c0_i32 = arith.constant 0 : i32
    %c0_i32_0 = arith.constant 0 : i32
    %c0_i32_1 = arith.constant 0 : i32
    return %arg0, %c0_i32, %c0_i32_0 : i32, i32, i32
  }
  func.func @transform_1(%arg0: i32, %arg1: i32) -> (i32, i32) {
    %c0_i32 = arith.constant 0 : i32
    %c0_i32_0 = arith.constant 0 : i32
    %c0_i32_1 = arith.constant 0 : i32
    return %c0_i32, %c0_i32_0 : i32, i32
  }
  func.func @transform_2(%arg0: i32, %arg1: i32) -> (i32, i32, i32) {
    %c0_i32 = arith.constant 0 : i32
    %c0_i32_0 = arith.constant 0 : i32
    %c0_i32_1 = arith.constant 0 : i32
    %c0_i32_2 = arith.constant 0 : i32
    return %c0_i32, %c0_i32_0, %c0_i32_1 : i32, i32, i32
  }
  func.func @transform_3(%arg0: i32, %arg1: i32) -> (i32, i32) {
    %c0_i32 = arith.constant 0 : i32
    %c0_i32_0 = arith.constant 0 : i32
    %c0_i32_1 = arith.constant 0 : i32
    return %c0_i32, %c0_i32_0 : i32, i32
  }
  func.func @transform_4(%arg0: i32, %arg1: i32) -> (i32, i32) {
    %c0_i32 = arith.constant 0 : i32
    %c0_i32_0 = arith.constant 0 : i32
    %c0_i32_1 = arith.constant 0 : i32
    return %c0_i32, %c0_i32_0 : i32, i32
  }
  func.func @transform_5(%arg0: i32, %arg1: i32) -> (i32, i32) {
    %c0_i32 = arith.constant 0 : i32
    %c0_i32_0 = arith.constant 0 : i32
    %c0_i32_1 = arith.constant 0 : i32
    return %c0_i32, %c0_i32_0 : i32, i32
  }
  func.func @transform_6(%arg0: i32, %arg1: i32) -> (i32, i32) {
    %c0_i32 = arith.constant 0 : i32
    %c0_i32_0 = arith.constant 0 : i32
    %c0_i32_1 = arith.constant 0 : i32
    return %c0_i32, %c0_i32_0 : i32, i32
  }
  func.func @transform_7(%arg0: i32, %arg1: i32) -> (i32, i32, i32) {
    %c0_i32 = arith.constant 0 : i32
    %c0_i32_0 = arith.constant 0 : i32
    return %arg0, %arg1, %c0_i32 : i32, i32, i32
  }
}

</mosaic_0001>

<llo_original>
// kernel: bottleneck_base.1
$region0: #{bottleneck_base.1}
  #allocation0 [shape = 'u32[]', space=smem, size = 0x4, offset = 0x4, fixed_abs, tag = 'smem constant byte address 0x4 - core index']
  #allocation1 [shape = 'u32[144,128]{1,0:T(1,128)}', space=vmem, size = 0x12000, scoped, tag = 'internal scratch']
  #allocation2 [shape = 'f32[18,18,2]{2,1,0:T(8,128)}', space=vmem, size = 0x36000, scoped, tag = 'scratch operand']
  %s0 = inlined_call_operand.vmem [shape: f32[2,256,4], index: 0, kind: input, shape index: {}]
  %s1 = inlined_call_operand.vmem [shape: f32[4,2], index: 1, kind: input, shape index: {}]
  %s2 = inlined_call_operand.vmem [shape: f32[3,6,4], index: 2, kind: input, shape index: {}]
  %s3 = inlined_call_operand.vmem [shape: f32[1,2], index: 3, kind: input, shape index: {}]
  %s4 = inlined_call_operand.vmem [shape: f32[1,2], index: 4, kind: input, shape index: {}]
  %s5 = inlined_call_operand.vmem [shape: f32[1,4], index: 5, kind: input, shape index: {}]
  %s6 = inlined_call_operand.vmem [shape: f32[1,4], index: 6, kind: input, shape index: {}]
  %s7 = inlined_call_operand.vmem [shape: f32[2,256,4], index: 7, kind: output, shape index: {}]
  %s8 = sld [smem:[#allocation0]]
  $region61: #{bottleneck_base.1} parent=0
    _
  %s10 = ssub.s32 1, %s8
  %s11 = scalar_select 0, %s10, %s8
  loop: start=0, step=1, limit=4
  $region2: #{bottleneck_base.1} parent=0 // loop_pre_header
    _
  $region3: #{bottleneck_base.1} parent=0 // loop_header
    %s13 = sphi 0, %s17
    %p14 = scmp.ge.s32.totalorder %s13, 4
    %s20 = sphi 0, %s32
    %s21 = sphi 0, %s28
    %s22 = sphi 0, %s20
    %s23 = sphi 0, %s21
    %s24 = sphi 0, %s22
    %s25 = sphi 0, %s23
    %s35 = sphi 0, %s37
    %s38 = sphi 0, %s35
    %s39 = sphi 0, %s38
    %s55 = sphi 0, %s39
    %s59 = sphi 0, %s59
    %s61 = sphi 0, %s59
    %s62 = sphi 0, %s61
    %s76 = sphi 0, %s62
    %s80 = sphi 0, %s80
    %s82 = sphi 0, %s80
    %s83 = sphi 0, %s82
    %s97 = sphi 0, %s83
    %s101 = sphi 0, %s101
    %s103 = sphi 0, %s101
    %s104 = sphi 0, %s103
    %s118 = sphi 0, %s104
    %s122 = sphi 0, %s122
    %s124 = sphi 0, %s122
    %s125 = sphi 0, %s124
    %s139 = sphi 0, %s125
    %s143 = sphi 0, %s143
    %s145 = sphi 0, %s143
    %s146 = sphi 0, %s145
    %s160 = sphi 0, %s146
    %s164 = sphi 0, %s164
    %s166 = sphi 0, %s164
    %s167 = sphi 0, %s166
    %s181 = sphi 0, %s167
    %s189 = sphi 0, %s191
    %s192 = sphi 0, %s189
    %s193 = sphi 0, %s192
    %s209 = sphi 0, %s193
  $region4: #{bottleneck_base.1} parent=0 // loop_header_branch
    %16 = sbr.rel (%p14) target = $region8
  $region5: #{bottleneck_base.1} parent=0 // loop_body
    %s18 = ssub.s32 %s13, 1
    %s19 = ssub.s32 %s13, 2
    %s26 = sadd.s32 1, %s21
    %p27 = scmp.ge.s32.totalorder %s26, 1
    %s28 = scalar_select %p27, 0, %s26
    %s29 = sadd.s32 1, %s20
    %s30 = scalar_select %p27, %s29, %s20
    %p31 = scmp.ge.s32.totalorder %s30, 2
    %s32 = scalar_select %p31, 0, %s30
    %s33 = ssub.s32 %s20, %s32
    %p34 = scmp.eq.s32.totalorder %s33, 0
    %s36 = sadd.s32 %s35, 1
    %s37 = scalar_select %p34, %s35, %s36
    %p40 = pneg %p34
    %p41 = scmp.eq.s32.totalorder %s13, 1
    %p42 = por %p40, %p41
    %p43 = scmp.ne.s32.totalorder %s35, %s38
    %p44 = scmp.eq.s32.totalorder %s13, 0
    %p45 = por %p43, %p44
    %p46 = scmp.ne.s32.totalorder %s35, %s38
    %p47 = scmp.eq.s32.totalorder %s18, 1
    %p48 = por %p46, %p47
    %p49 = scmp.ne.s32.totalorder %s38, %s39
    %p50 = scmp.eq.s32.totalorder %s18, 0
    %p51 = por %p49, %p50
    %p52 = scmp.ne.s32.totalorder %s38, %s39
    %p53 = scmp.eq.s32.totalorder %s19, 1
    %p54 = por %p52, %p53
    %p56 = scmp.ne.s32.totalorder %s39, %s55
    %p57 = scmp.eq.s32.totalorder %s19, 0
    %p58 = por %p56, %p57
    %s60 = sadd.s32 %s59, 1
    %p63 = scmp.eq.s32.totalorder %s13, 1
    %p64 = scmp.ne.s32.totalorder %s59, %s61
    %p65 = scmp.eq.s32.totalorder %s13, 0
    %p66 = por %p64, %p65
    %p67 = scmp.ne.s32.totalorder %s59, %s61
    %p68 = scmp.eq.s32.totalorder %s18, 1
    %p69 = por %p67, %p68
    %p70 = scmp.ne.s32.totalorder %s61, %s62
    %p71 = scmp.eq.s32.totalorder %s18, 0
    %p72 = por %p70, %p71
    %p73 = scmp.ne.s32.totalorder %s61, %s62
    %p74 = scmp.eq.s32.totalorder %s19, 1
    %p75 = por %p73, %p74
    %p77 = scmp.ne.s32.totalorder %s62, %s76
    %p78 = scmp.eq.s32.totalorder %s19, 0
    %p79 = por %p77, %p78
    %s81 = sadd.s32 %s80, 1
    %p84 = scmp.eq.s32.totalorder %s13, 1
    %p85 = scmp.ne.s32.totalorder %s80, %s82
    %p86 = scmp.eq.s32.totalorder %s13, 0
    %p87 = por %p85, %p86
    %p88 = scmp.ne.s32.totalorder %s80, %s82
    %p89 = scmp.eq.s32.totalorder %s18, 1
    %p90 = por %p88, %p89
    %p91 = scmp.ne.s32.totalorder %s82, %s83
    %p92 = scmp.eq.s32.totalorder %s18, 0
    %p93 = por %p91, %p92
    %p94 = scmp.ne.s32.totalorder %s82, %s83
    %p95 = scmp.eq.s32.totalorder %s19, 1
    %p96 = por %p94, %p95
    %p98 = scmp.ne.s32.totalorder %s83, %s97
    %p99 = scmp.eq.s32.totalorder %s19, 0
    %p100 = por %p98, %p99
    %s102 = sadd.s32 %s101, 1
    %p105 = scmp.eq.s32.totalorder %s13, 1
    %p106 = scmp.ne.s32.totalorder %s101, %s103
    %p107 = scmp.eq.s32.totalorder %s13, 0
    %p108 = por %p106, %p107
    %p109 = scmp.ne.s32.totalorder %s101, %s103
    %p110 = scmp.eq.s32.totalorder %s18, 1
    %p111 = por %p109, %p110
    %p112 = scmp.ne.s32.totalorder %s103, %s104
    %p113 = scmp.eq.s32.totalorder %s18, 0
    %p114 = por %p112, %p113
    %p115 = scmp.ne.s32.totalorder %s103, %s104
    %p116 = scmp.eq.s32.totalorder %s19, 1
    %p117 = por %p115, %p116
    %p119 = scmp.ne.s32.totalorder %s104, %s118
    %p120 = scmp.eq.s32.totalorder %s19, 0
    %p121 = por %p119, %p120
    %s123 = sadd.s32 %s122, 1
    %p126 = scmp.eq.s32.totalorder %s13, 1
    %p127 = scmp.ne.s32.totalorder %s122, %s124
    %p128 = scmp.eq.s32.totalorder %s13, 0
    %p129 = por %p127, %p128
    %p130 = scmp.ne.s32.totalorder %s122, %s124
    %p131 = scmp.eq.s32.totalorder %s18, 1
    %p132 = por %p130, %p131
    %p133 = scmp.ne.s32.totalorder %s124, %s125
    %p134 = scmp.eq.s32.totalorder %s18, 0
    %p135 = por %p133, %p134
    %p136 = scmp.ne.s32.totalorder %s124, %s125
    %p137 = scmp.eq.s32.totalorder %s19, 1
    %p138 = por %p136, %p137
    %p140 = scmp.ne.s32.totalorder %s125, %s139
    %p141 = scmp.eq.s32.totalorder %s19, 0
    %p142 = por %p140, %p141
    %s144 = sadd.s32 %s143, 1
    %p147 = scmp.eq.s32.totalorder %s13, 1
    %p148 = scmp.ne.s32.totalorder %s143, %s145
    %p149 = scmp.eq.s32.totalorder %s13, 0
    %p150 = por %p148, %p149
    %p151 = scmp.ne.s32.totalorder %s143, %s145
    %p152 = scmp.eq.s32.totalorder %s18, 1
    %p153 = por %p151, %p152
    %p154 = scmp.ne.s32.totalorder %s145, %s146
    %p155 = scmp.eq.s32.totalorder %s18, 0
    %p156 = por %p154, %p155
    %p157 = scmp.ne.s32.totalorder %s145, %s146
    %p158 = scmp.eq.s32.totalorder %s19, 1
    %p159 = por %p157, %p158
    %p161 = scmp.ne.s32.totalorder %s146, %s160
    %p162 = scmp.eq.s32.totalorder %s19, 0
    %p163 = por %p161, %p162
    %s165 = sadd.s32 %s164, 1
    %p168 = scmp.eq.s32.totalorder %s13, 1
    %p169 = scmp.ne.s32.totalorder %s164, %s166
    %p170 = scmp.eq.s32.totalorder %s13, 0
    %p171 = por %p169, %p170
    %p172 = scmp.ne.s32.totalorder %s164, %s166
    %p173 = scmp.eq.s32.totalorder %s18, 1
    %p174 = por %p172, %p173
    %p175 = scmp.ne.s32.totalorder %s166, %s167
    %p176 = scmp.eq.s32.totalorder %s18, 0
    %p177 = por %p175, %p176
    %p178 = scmp.ne.s32.totalorder %s166, %s167
    %p179 = scmp.eq.s32.totalorder %s19, 1
    %p180 = por %p178, %p179
    %p182 = scmp.ne.s32.totalorder %s167, %s181
    %p183 = scmp.eq.s32.totalorder %s19, 0
    %p184 = por %p182, %p183
    %s185 = ssub.s32 %s20, %s32
    %s186 = ssub.s32 %s21, %s28
    %s187 = sor.u32 %s185, %s186
    %p188 = scmp.eq.s32.totalorder %s187, 0
    %s190 = sadd.s32 %s189, 1
    %s191 = scalar_select %p188, %s189, %s190
    %p194 = pneg %p188
    %p195 = scmp.eq.s32.totalorder %s13, 1
    %p196 = por %p194, %p195
    %p197 = scmp.ne.s32.totalorder %s189, %s192
    %p198 = scmp.eq.s32.totalorder %s13, 0
    %p199 = por %p197, %p198
    %p200 = scmp.ne.s32.totalorder %s189, %s192
    %p201 = scmp.eq.s32.totalorder %s18, 1
    %p202 = por %p200, %p201
    %p203 = scmp.ne.s32.totalorder %s192, %s193
    %p204 = scmp.eq.s32.totalorder %s18, 0
    %p205 = por %p203, %p204
    %p206 = scmp.ne.s32.totalorder %s192, %s193
    %p207 = scmp.eq.s32.totalorder %s19, 1
    %p208 = por %p206, %p207
    %p210 = scmp.ne.s32.totalorder %s193, %s209
    %p211 = scmp.eq.s32.totalorder %s19, 0
    %p212 = por %p210, %p211
    %p213 = scmp.le.s32.totalorder 1, %s13
    %p214 = scmp.lt.s32.totalorder %s13, 3
    %p215 = pnand %p213, %p214
    %p216 = pneg %p215
    // Predicated region
    $region9: #{bottleneck_base.1} parent=5 // pred_check
      _
    $region10: #{bottleneck_base.1} parent=5 // pred_check_branch
      %218 = sbr.rel (%p215) target = $region12
    $region11: #{bottleneck_base.1} parent=5 // pred_region
      %s219 = ssub.s32 %s13, 1
      // Predicated region
      $region13: #{bottleneck_base.1} parent=11 // pred_check
        %p220 = pneg %p72
      $region14: #{bottleneck_base.1} parent=11 // pred_check_branch
        %222 = sbr.rel (%p220) target = $region16
      $region15: #{bottleneck_base.1} parent=11 // pred_region
        _
      $region16: #{bottleneck_base.1} parent=11 // pred_fallthru
        _
      // Predicated region
      $region17: #{bottleneck_base.1} parent=11 // pred_check
        %p223 = pneg %p93
      $region18: #{bottleneck_base.1} parent=11 // pred_check_branch
        %225 = sbr.rel (%p223) target = $region20
      $region19: #{bottleneck_base.1} parent=11 // pred_region
        _
      $region20: #{bottleneck_base.1} parent=11 // pred_fallthru
        _
      // Predicated region
      $region21: #{bottleneck_base.1} parent=11 // pred_check
        %p226 = pneg %p114
      $region22: #{bottleneck_base.1} parent=11 // pred_check_branch
        %228 = sbr.rel (%p226) target = $region24
      $region23: #{bottleneck_base.1} parent=11 // pred_region
        _
      $region24: #{bottleneck_base.1} parent=11 // pred_fallthru
        _
      // Predicated region
      $region25: #{bottleneck_base.1} parent=11 // pred_check
        %p229 = pneg %p135
      $region26: #{bottleneck_base.1} parent=11 // pred_check_branch
        %231 = sbr.rel (%p229) target = $region28
      $region27: #{bottleneck_base.1} parent=11 // pred_region
        _
      $region28: #{bottleneck_base.1} parent=11 // pred_fallthru
        _
      // Predicated region
      $region29: #{bottleneck_base.1} parent=11 // pred_check
        %p232 = pneg %p156
      $region30: #{bottleneck_base.1} parent=11 // pred_check_branch
        %234 = sbr.rel (%p232) target = $region32
      $region31: #{bottleneck_base.1} parent=11 // pred_region
        _
      $region32: #{bottleneck_base.1} parent=11 // pred_fallthru
        _
      // Predicated region
      $region33: #{bottleneck_base.1} parent=11 // pred_check
        %p235 = pneg %p177
      $region34: #{bottleneck_base.1} parent=11 // pred_check_branch
        %237 = sbr.rel (%p235) target = $region36
      $region35: #{bottleneck_base.1} parent=11 // pred_region
        _
      $region36: #{bottleneck_base.1} parent=11 // pred_fallthru
        _
    $region12: #{bottleneck_base.1} parent=5 // pred_fallthru
      _
    %p238 = scmp.lt.s32.totalorder %s13, 2
    // Predicated region
    $region37: #{bottleneck_base.1} parent=5 // pred_check
      %p239 = pneg %p238
    $region38: #{bottleneck_base.1} parent=5 // pred_check_branch
      %241 = sbr.rel (%p239) target = $region40
    $region39: #{bottleneck_base.1} parent=5 // pred_region
      // Predicated region
      $region41: #{bottleneck_base.1} parent=39 // pred_check
        %p242 = pneg %p45
      $region42: #{bottleneck_base.1} parent=39 // pred_check_branch
        %244 = sbr.rel (%p242) target = $region44
      $region43: #{bottleneck_base.1} parent=39 // pred_region
        %p245 = scmp.lt.s32.totalorder %s20, 1
        %s246 = scalar_select %p245, %s20, 1
        %s247 = smul.addr %s246, 32
        %s248 = smul.addr %s247, 8
        %s249 = scalar_lea.vmem %s0, %s248
      $region44: #{bottleneck_base.1} parent=39 // pred_fallthru
        _
    $region40: #{bottleneck_base.1} parent=5 // pred_fallthru
      _
    %p250 = scmp.le.s32.totalorder 1, %s13
    %p251 = scmp.lt.s32.totalorder %s13, 3
    %p252 = pnand %p250, %p251
    %p253 = pneg %p252
    // Predicated region
    $region45: #{bottleneck_base.1} parent=5 // pred_check
      _
    $region46: #{bottleneck_base.1} parent=5 // pred_check_branch
      %255 = sbr.rel (%p252) target = $region48
    $region47: #{bottleneck_base.1} parent=5 // pred_region
      %s256 = ssub.s32 %s13, 1
      %p257 = scmp.lt.s32.totalorder %s22, 1
      %s258 = scalar_select %p257, %s22, 1
      %s259 = smul.addr %s258, 32
      %s260 = smul.addr %s259, 8
      %s261 = scalar_lea.vmem %s0, %s260
      %p262 = pneg %p51
      %p263 = pneg %p48
      %p264 = pneg %p72
      %p265 = pneg %p69
      %p266 = pneg %p93
      %p267 = pneg %p90
      %p268 = pneg %p114
      %p269 = pneg %p111
      %p270 = pneg %p135
      %p271 = pneg %p132
      %p272 = pneg %p156
      %p273 = pneg %p153
      %p274 = pneg %p177
      %p275 = pneg %p174
      %p276 = pneg %p205
      %p277 = pneg %p202
      %s278 = smul.u32 32, %s23
      %p279 = scmp.lt.s32.totalorder %s22, 1
      %s280 = scalar_select %p279, %s22, 1
      %p281 = scmp.lt.s32.totalorder %s278, 31
      %s282 = scalar_select %p281, %s278, 31
      %s283 = smul.addr %s280, 32
      %s284 = sadd.s32 %s282, %s283
      %s285 = smul.addr %s284, 8
      %s286 = scalar_lea.vmem %s7, %s285
      %p287 = scmp.lt.s32.totalorder %s22, 1
      %s288 = scalar_select %p287, %s22, 1
      %s289 = smul.addr %s288, 32
      %s290 = smul.addr %s289, 8
      %s291 = scalar_lea.vmem %s0, %s290
      %s292 = smul.u32 32, %s23
      %p293 = scmp.lt.s32.totalorder %s22, 1
      %s294 = scalar_select %p293, %s22, 1
      %p295 = scmp.lt.s32.totalorder %s292, 31
      %s296 = scalar_select %p295, %s292, 31
      %s297 = smul.addr %s294, 32
      %s298 = sadd.s32 %s296, %s297
      %s299 = smul.addr %s298, 8
      %s300 = scalar_lea.vmem %s7, %s299
      %s301 = smul.u32 32, %s23
      %s302 = smul.u32 %s23, 256
      %s303 = scalar_lea.vmem %s291, %s302
      %v304 = vld [vmem:[%s303] sm:$0xff]
      %v305 = vld [vmem:[%s303 + $0x8] sm:$0xff]
      %v306 = vld [vmem:[%s303 + $0x10] sm:$0xff]
      %v307 = vld [vmem:[%s303 + $0x18] sm:$0xff]
      %v308 = vld [vmem:[%s303 + $0x20] sm:$0xff]
      %v309 = vld [vmem:[%s303 + $0x28] sm:$0xff]
      %v310 = vld [vmem:[%s303 + $0x30] sm:$0xff]
      %v311 = vld [vmem:[%s303 + $0x38] sm:$0xff]
      %v312 = vld [vmem:[%s303 + $0x40] sm:$0xff]
      %v313 = vld [vmem:[%s303 + $0x48] sm:$0xff]
      %v314 = vld [vmem:[%s303 + $0x50] sm:$0xff]
      %v315 = vld [vmem:[%s303 + $0x58] sm:$0xff]
      %v316 = vld [vmem:[%s303 + $0x60] sm:$0xff]
      %v317 = vld [vmem:[%s303 + $0x68] sm:$0xff]
      %v318 = vld [vmem:[%s303 + $0x70] sm:$0xff]
      %v319 = vld [vmem:[%s303 + $0x78] sm:$0xff]
      %v320 = vld [vmem:[%s303 + $0x80] sm:$0xff]
      %v321 = vld [vmem:[%s303 + $0x88] sm:$0xff]
      %v322 = vld [vmem:[%s303 + $0x90] sm:$0xff]
      %v323 = vld [vmem:[%s303 + $0x98] sm:$0xff]
      %v324 = vld [vmem:[%s303 + $0xa0] sm:$0xff]
      %v325 = vld [vmem:[%s303 + $0xa8] sm:$0xff]
      %v326 = vld [vmem:[%s303 + $0xb0] sm:$0xff]
      %v327 = vld [vmem:[%s303 + $0xb8] sm:$0xff]
      %v328 = vld [vmem:[%s303 + $0xc0] sm:$0xff]
      %v329 = vld [vmem:[%s303 + $0xc8] sm:$0xff]
      %v330 = vld [vmem:[%s303 + $0xd0] sm:$0xff]
      %v331 = vld [vmem:[%s303 + $0xd8] sm:$0xff]
      %v332 = vld [vmem:[%s303 + $0xe0] sm:$0xff]
      %v333 = vld [vmem:[%s303 + $0xe8] sm:$0xff]
      %v334 = vld [vmem:[%s303 + $0xf0] sm:$0xff]
      %v335 = vld [vmem:[%s303 + $0xf8] sm:$0xff]
      %v336 = vld [vmem:[%s1] sm:$0xf]
      %vm337 = vcmask 31744
      %v339 = vsel %vm337, %v304, 0
      %v342 = vsel %vm337, %v305, 0
      %v345 = vsel %vm337, %v306, 0
      %v348 = vsel %vm337, %v307, 0
      %v351 = vsel %vm337, %v308, 0
      %v354 = vsel %vm337, %v309, 0
      %v357 = vsel %vm337, %v310, 0
      %v360 = vsel %vm337, %v311, 0
      %v363 = vsel %vm337, %v312, 0
      %v366 = vsel %vm337, %v313, 0
      %v369 = vsel %vm337, %v314, 0
      %v372 = vsel %vm337, %v315, 0
      %v375 = vsel %vm337, %v316, 0
      %v378 = vsel %vm337, %v317, 0
      %v381 = vsel %vm337, %v318, 0
      %v384 = vsel %vm337, %v319, 0
      %v387 = vsel %vm337, %v320, 0
      %v390 = vsel %vm337, %v321, 0
      %v393 = vsel %vm337, %v322, 0
      %v396 = vsel %vm337, %v323, 0
      %v399 = vsel %vm337, %v324, 0
      %v402 = vsel %vm337, %v325, 0
      %v405 = vsel %vm337, %v326, 0
      %v408 = vsel %vm337, %v327, 0
      %v411 = vsel %vm337, %v328, 0
      %v414 = vsel %vm337, %v329, 0
      %v417 = vsel %vm337, %v330, 0
      %v420 = vsel %vm337, %v331, 0
      %v423 = vsel %vm337, %v332, 0
      %v426 = vsel %vm337, %v333, 0
      %v429 = vsel %vm337, %v334, 0
      %v432 = vsel %vm337, %v335, 0
      %vm434 = vcmask 1043456
      %v436 = vsel %vm434, %v336, 0
      %438 = vmatprep.subr.mxu0 0.0
      %439 = vmatpush1.msra.mxu0 0.0
      %440 = vmatprep.subr.mxu0 0.0
      %441 = vmatpush1.msra.mxu0 0.0
      %442 = vmatprep.subr.mxu0 0.0
      %443 = vmatpush1.msra.mxu0 0.0
      %444 = vmatprep.subr.mxu0 0.0
      %445 = vmatpush1.msra.mxu0 0.0
      %446 = vmatprep.subr.mxu0 0.0
      %447 = vmatpush1.msra.mxu0 0.0
      %448 = vmatprep.subr.mxu0 0.0
      %449 = vmatpush1.msra.mxu0 0.0
      %450 = vmatprep.subr.mxu0 0.0
      %451 = vmatpush1.msra.mxu0 0.0
      %452 = vmatprep.subr.mxu0 0.0
      %453 = vmatpush1.msra.mxu0 0.0
      %454 = vmatprep.subr.mxu0 0.0
      %455 = vmatpush1.msra.mxu0 0.0
      %456 = vmatprep.subr.mxu0 0.0
      %457 = vmatpush1.msra.mxu0 0.0
      %458 = vmatprep.subr.mxu0 0.0
      %459 = vmatpush1.msra.mxu0 0.0
      %460 = vmatprep.subr.mxu0 0.0
      %461 = vmatpush1.msra.mxu0 0.0
      %462 = vmatprep.subr.mxu0 0.0
      %463 = vmatpush1.msra.mxu0 0.0
      %464 = vmatprep.subr.mxu0 0.0
      %465 = vmatpush1.msra.mxu0 0.0
      %466 = vmatprep.subr.mxu0 0.0
      %467 = vmatpush1.msra.mxu0 0.0
      %468 = vmatprep.subr.mxu0 0.0
      %469 = vmatpush1.msra.mxu0 %v436
      %470 = vmatprep.subr.mxu0 0.0
      %471 = vmatpush2.msra.mxu0 0.0
      %472 = vmatprep.subr.mxu0 0.0
      %473 = vmatpush2.msra.mxu0 0.0
      %474 = vmatprep.subr.mxu0 0.0
      %475 = vmatpush2.msra.mxu0 0.0
      %476 = vmatprep.subr.mxu0 0.0
      %477 = vmatpush2.msra.mxu0 0.0
      %478 = vmatprep.subr.mxu0 0.0
      %479 = vmatpush2.msra.mxu0 0.0
      %480 = vmatprep.subr.mxu0 0.0
      %481 = vmatpush2.msra.mxu0 0.0
      %482 = vmatprep.subr.mxu0 0.0
      %483 = vmatpush2.msra.mxu0 0.0
      %484 = vmatprep.subr.mxu0 0.0
      %485 = vmatpush2.msra.mxu0 0.0
      %486 = vmatprep.subr.mxu0 0.0
      %487 = vmatpush2.msra.mxu0 0.0
      %488 = vmatprep.subr.mxu0 0.0
      %489 = vmatpush2.msra.mxu0 0.0
      %490 = vmatprep.subr.mxu0 0.0
      %491 = vmatpush2.msra.mxu0 0.0
      %492 = vmatprep.subr.mxu0 0.0
      %493 = vmatpush2.msra.mxu0 0.0
      %494 = vmatprep.subr.mxu0 0.0
      %495 = vmatpush2.msra.mxu0 0.0
      %496 = vmatprep.subr.mxu0 0.0
      %497 = vmatpush2.msra.mxu0 0.0
      %498 = vmatprep.subr.mxu0 0.0
      %499 = vmatpush2.msra.mxu0 0.0
      %500 = vmatprep.subr.mxu0 0.0
      %501 = vmatpush2.msra.mxu0 0.0
      %502 = vmatprep.mubr.f32.mxu0 0.0
      %503 = vmatmul.mubr.f32.gmra.mxu0 %v339
      %v504 = vpop.f32.mrf.mxu0
      %v505 = vadd.f32 0.0, %v504
      %v506 = vpop.f32.mrf.mxu0
      %507 = vmatprep.mubr.f32.mxu0 0.0
      %508 = vmatmul.mubr.f32.gmra.mxu0 %v342
      %v509 = vpop.f32.mrf.mxu0
      %v510 = vadd.f32 0.0, %v509
      %v511 = vpop.f32.mrf.mxu0
      %512 = vmatprep.mubr.f32.mxu0 0.0
      %513 = vmatmul.mubr.f32.gmra.mxu0 %v345
      %v514 = vpop.f32.mrf.mxu0
      %v515 = vadd.f32 0.0, %v514
      %v516 = vpop.f32.mrf.mxu0
      %517 = vmatprep.mubr.f32.mxu0 0.0
      %518 = vmatmul.mubr.f32.gmra.mxu0 %v348
      %v519 = vpop.f32.mrf.mxu0
      %v520 = vadd.f32 0.0, %v519
      %v521 = vpop.f32.mrf.mxu0
      %522 = vmatprep.mubr.f32.mxu0 0.0
      %523 = vmatmul.mubr.f32.gmra.mxu0 %v351
      %v524 = vpop.f32.mrf.mxu0
      %v525 = vadd.f32 0.0, %v524
      %v526 = vpop.f32.mrf.mxu0
      %527 = vmatprep.mubr.f32.mxu0 0.0
      %528 = vmatmul.mubr.f32.gmra.mxu0 %v354
      %v529 = vpop.f32.mrf.mxu0
      %v530 = vadd.f32 0.0, %v529
      %v531 = vpop.f32.mrf.mxu0
      %532 = vmatprep.mubr.f32.mxu0 0.0
      %533 = vmatmul.mubr.f32.gmra.mxu0 %v357
      %v534 = vpop.f32.mrf.mxu0
      %v535 = vadd.f32 0.0, %v534
      %v536 = vpop.f32.mrf.mxu0
      %537 = vmatprep.mubr.f32.mxu0 0.0
      %538 = vmatmul.mubr.f32.gmra.mxu0 %v360
      %v539 = vpop.f32.mrf.mxu0
      %v540 = vadd.f32 0.0, %v539
      %v541 = vpop.f32.mrf.mxu0
      %542 = vmatprep.mubr.f32.mxu0 0.0
      %543 = vmatmul.mubr.f32.gmra.mxu0 %v363
      %v544 = vpop.f32.mrf.mxu0
      %v545 = vadd.f32 0.0, %v544
      %v546 = vpop.f32.mrf.mxu0
      %547 = vmatprep.mubr.f32.mxu0 0.0
      %548 = vmatmul.mubr.f32.gmra.mxu0 %v366
      %v549 = vpop.f32.mrf.mxu0
      %v550 = vadd.f32 0.0, %v549
      %v551 = vpop.f32.mrf.mxu0
      %552 = vmatprep.mubr.f32.mxu0 0.0
      %553 = vmatmul.mubr.f32.gmra.mxu0 %v369
      %v554 = vpop.f32.mrf.mxu0
      %v555 = vadd.f32 0.0, %v554
      %v556 = vpop.f32.mrf.mxu0
      %557 = vmatprep.mubr.f32.mxu0 0.0
      %558 = vmatmul.mubr.f32.gmra.mxu0 %v372
      %v559 = vpop.f32.mrf.mxu0
      %v560 = vadd.f32 0.0, %v559
      %v561 = vpop.f32.mrf.mxu0
      %562 = vmatprep.mubr.f32.mxu0 0.0
      %563 = vmatmul.mubr.f32.gmra.mxu0 %v375
      %v564 = vpop.f32.mrf.mxu0
      %v565 = vadd.f32 0.0, %v564
      %v566 = vpop.f32.mrf.mxu0
      %567 = vmatprep.mubr.f32.mxu0 0.0
      %568 = vmatmul.mubr.f32.gmra.mxu0 %v378
      %v569 = vpop.f32.mrf.mxu0
      %v570 = vadd.f32 0.0, %v569
      %v571 = vpop.f32.mrf.mxu0
      %572 = vmatprep.mubr.f32.mxu0 0.0
      %573 = vmatmul.mubr.f32.gmra.mxu0 %v381
      %v574 = vpop.f32.mrf.mxu0
      %v575 = vadd.f32 0.0, %v574
      %v576 = vpop.f32.mrf.mxu0
      %577 = vmatprep.mubr.f32.mxu0 0.0
      %578 = vmatmul.mubr.f32.gmra.mxu0 %v384
      %v579 = vpop.f32.mrf.mxu0
      %v580 = vadd.f32 0.0, %v579
      %v581 = vpop.f32.mrf.mxu0
      %582 = vmatprep.mubr.f32.mxu0 0.0
      %583 = vmatmul.mubr.f32.gmra.mxu0 %v387
      %v584 = vpop.f32.mrf.mxu0
      %v585 = vadd.f32 0.0, %v584
      %v586 = vpop.f32.mrf.mxu0
      %587 = vmatprep.mubr.f32.mxu0 0.0
      %588 = vmatmul.mubr.f32.gmra.mxu0 %v390
      %v589 = vpop.f32.mrf.mxu0
      %v590 = vadd.f32 0.0, %v589
      %v591 = vpop.f32.mrf.mxu0
      %592 = vmatprep.mubr.f32.mxu0 0.0
      %593 = vmatmul.mubr.f32.gmra.mxu0 %v393
      %v594 = vpop.f32.mrf.mxu0
      %v595 = vadd.f32 0.0, %v594
      %v596 = vpop.f32.mrf.mxu0
      %597 = vmatprep.mubr.f32.mxu0 0.0
      %598 = vmatmul.mubr.f32.gmra.mxu0 %v396
      %v599 = vpop.f32.mrf.mxu0
      %v600 = vadd.f32 0.0, %v599
      %v601 = vpop.f32.mrf.mxu0
      %602 = vmatprep.mubr.f32.mxu0 0.0
      %603 = vmatmul.mubr.f32.gmra.mxu0 %v399
      %v604 = vpop.f32.mrf.mxu0
      %v605 = vadd.f32 0.0, %v604
      %v606 = vpop.f32.mrf.mxu0
      %607 = vmatprep.mubr.f32.mxu0 0.0
      %608 = vmatmul.mubr.f32.gmra.mxu0 %v402
      %v609 = vpop.f32.mrf.mxu0
      %v610 = vadd.f32 0.0, %v609
      %v611 = vpop.f32.mrf.mxu0
      %612 = vmatprep.mubr.f32.mxu0 0.0
      %613 = vmatmul.mubr.f32.gmra.mxu0 %v405
      %v614 = vpop.f32.mrf.mxu0
      %v615 = vadd.f32 0.0, %v614
      %v616 = vpop.f32.mrf.mxu0
      %617 = vmatprep.mubr.f32.mxu0 0.0
      %618 = vmatmul.mubr.f32.gmra.mxu0 %v408
      %v619 = vpop.f32.mrf.mxu0
      %v620 = vadd.f32 0.0, %v619
      %v621 = vpop.f32.mrf.mxu0
      %622 = vmatprep.mubr.f32.mxu0 0.0
      %623 = vmatmul.mubr.f32.gmra.mxu0 %v411
      %v624 = vpop.f32.mrf.mxu0
      %v625 = vadd.f32 0.0, %v624
      %v626 = vpop.f32.mrf.mxu0
      %627 = vmatprep.mubr.f32.mxu0 0.0
      %628 = vmatmul.mubr.f32.gmra.mxu0 %v414
      %v629 = vpop.f32.mrf.mxu0
      %v630 = vadd.f32 0.0, %v629
      %v631 = vpop.f32.mrf.mxu0
      %632 = vmatprep.mubr.f32.mxu0 0.0
      %633 = vmatmul.mubr.f32.gmra.mxu0 %v417
      %v634 = vpop.f32.mrf.mxu0
      %v635 = vadd.f32 0.0, %v634
      %v636 = vpop.f32.mrf.mxu0
      %637 = vmatprep.mubr.f32.mxu0 0.0
      %638 = vmatmul.mubr.f32.gmra.mxu0 %v420
      %v639 = vpop.f32.mrf.mxu0
      %v640 = vadd.f32 0.0, %v639
      %v641 = vpop.f32.mrf.mxu0
      %642 = vmatprep.mubr.f32.mxu0 0.0
      %643 = vmatmul.mubr.f32.gmra.mxu0 %v423
      %v644 = vpop.f32.mrf.mxu0
      %v645 = vadd.f32 0.0, %v644
      %v646 = vpop.f32.mrf.mxu0
      %647 = vmatprep.mubr.f32.mxu0 0.0
      %648 = vmatmul.mubr.f32.gmra.mxu0 %v426
      %v649 = vpop.f32.mrf.mxu0
      %v650 = vadd.f32 0.0, %v649
      %v651 = vpop.f32.mrf.mxu0
      %652 = vmatprep.mubr.f32.mxu0 0.0
      %653 = vmatmul.mubr.f32.gmra.mxu0 %v429
      %v654 = vpop.f32.mrf.mxu0
      %v655 = vadd.f32 0.0, %v654
      %v656 = vpop.f32.mrf.mxu0
      %657 = vmatprep.mubr.f32.mxu0 0.0
      %658 = vmatmul.mubr.f32.gmra.mxu0 %v432
      %v659 = vpop.f32.mrf.mxu0
      %v660 = vadd.f32 0.0, %v659
      %v661 = vpop.f32.mrf.mxu0
      %662 = vdwg.mxu0
      %v663 = vld [vmem:[%s3] sm:$0x1]
      %v665 = vlaneseq
      %v666 = vshrl.u32 %v665, 7
      %v667 = vsub.s32 0, %v666
      %v668 = vrot.slane %v663, %v667
      %v670 = vmul.f32 %v505, %v668
      %v671 = vmul.f32 %v510, %v668
      %v672 = vmul.f32 %v515, %v668
      %v673 = vmul.f32 %v520, %v668
      %v674 = vmul.f32 %v525, %v668
      %v675 = vmul.f32 %v530, %v668
      %v676 = vmul.f32 %v535, %v668
      %v677 = vmul.f32 %v540, %v668
      %v678 = vmul.f32 %v545, %v668
      %v679 = vmul.f32 %v550, %v668
      %v680 = vmul.f32 %v555, %v668
      %v681 = vmul.f32 %v560, %v668
      %v682 = vmul.f32 %v565, %v668
      %v683 = vmul.f32 %v570, %v668
      %v684 = vmul.f32 %v575, %v668
      %v685 = vmul.f32 %v580, %v668
      %v686 = vmul.f32 %v585, %v668
      %v687 = vmul.f32 %v590, %v668
      %v688 = vmul.f32 %v595, %v668
      %v689 = vmul.f32 %v600, %v668
      %v690 = vmul.f32 %v605, %v668
      %v691 = vmul.f32 %v610, %v668
      %v692 = vmul.f32 %v615, %v668
      %v693 = vmul.f32 %v620, %v668
      %v694 = vmul.f32 %v625, %v668
      %v695 = vmul.f32 %v630, %v668
      %v696 = vmul.f32 %v635, %v668
      %v697 = vmul.f32 %v640, %v668
      %v698 = vmul.f32 %v645, %v668
      %v699 = vmul.f32 %v650, %v668
      %v700 = vmul.f32 %v655, %v668
      %v701 = vmul.f32 %v660, %v668
      %v702 = vld [vmem:[%s4] sm:$0x1]
      %v704 = vlaneseq
      %v705 = vshrl.u32 %v704, 7
      %v706 = vsub.s32 0, %v705
      %v707 = vrot.slane %v702, %v706
      %v709 = vadd.f32 %v670, %v707
      %v710 = vadd.f32 %v671, %v707
      %v711 = vadd.f32 %v672, %v707
      %v712 = vadd.f32 %v673, %v707
      %v713 = vadd.f32 %v674, %v707
      %v714 = vadd.f32 %v675, %v707
      %v715 = vadd.f32 %v676, %v707
      %v716 = vadd.f32 %v677, %v707
      %v717 = vadd.f32 %v678, %v707
      %v718 = vadd.f32 %v679, %v707
      %v719 = vadd.f32 %v680, %v707
      %v720 = vadd.f32 %v681, %v707
      %v721 = vadd.f32 %v682, %v707
      %v722 = vadd.f32 %v683, %v707
      %v723 = vadd.f32 %v684, %v707
      %v724 = vadd.f32 %v685, %v707
      %v725 = vadd.f32 %v686, %v707
      %v726 = vadd.f32 %v687, %v707
      %v727 = vadd.f32 %v688, %v707
      %v728 = vadd.f32 %v689, %v707
      %v729 = vadd.f32 %v690, %v707
      %v730 = vadd.f32 %v691, %v707
      %v731 = vadd.f32 %v692, %v707
      %v732 = vadd.f32 %v693, %v707
      %v733 = vadd.f32 %v694, %v707
      %v734 = vadd.f32 %v695, %v707
      %v735 = vadd.f32 %v696, %v707
      %v736 = vadd.f32 %v697, %v707
      %v737 = vadd.f32 %v698, %v707
      %v738 = vadd.f32 %v699, %v707
      %v739 = vadd.f32 %v700, %v707
      %v740 = vadd.f32 %v701, %v707
      %v741 = vsub.f32 0.0, %v709
      %v742 = vsub.f32 0.0, %v710
      %v743 = vsub.f32 0.0, %v711
      %v744 = vsub.f32 0.0, %v712
      %v745 = vsub.f32 0.0, %v713
      %v746 = vsub.f32 0.0, %v714
      %v747 = vsub.f32 0.0, %v715
      %v748 = vsub.f32 0.0, %v716
      %v749 = vsub.f32 0.0, %v717
      %v750 = vsub.f32 0.0, %v718
      %v751 = vsub.f32 0.0, %v719
      %v752 = vsub.f32 0.0, %v720
      %v753 = vsub.f32 0.0, %v721
      %v754 = vsub.f32 0.0, %v722
      %v755 = vsub.f32 0.0, %v723
      %v756 = vsub.f32 0.0, %v724
      %v757 = vsub.f32 0.0, %v725
      %v758 = vsub.f32 0.0, %v726
      %v759 = vsub.f32 0.0, %v727
      %v760 = vsub.f32 0.0, %v728
      %v761 = vsub.f32 0.0, %v729
      %v762 = vsub.f32 0.0, %v730
      %v763 = vsub.f32 0.0, %v731
      %v764 = vsub.f32 0.0, %v732
      %v765 = vsub.f32 0.0, %v733
      %v766 = vsub.f32 0.0, %v734
      %v767 = vsub.f32 0.0, %v735
      %v768 = vsub.f32 0.0, %v736
      %v769 = vsub.f32 0.0, %v737
      %v770 = vsub.f32 0.0, %v738
      %v771 = vsub.f32 0.0, %v739
      %v772 = vsub.f32 0.0, %v740
      %v773 = vmul.f32 %v741, 1.442695
      %v774 = vpow.pop %v773
      %v775 = vmul.f32 %v742, 1.442695
      %v776 = vpow.pop %v775
      %v777 = vmul.f32 %v743, 1.442695
      %v778 = vpow.pop %v777
      %v779 = vmul.f32 %v744, 1.442695
      %v780 = vpow.pop %v779
      %v781 = vmul.f32 %v745, 1.442695
      %v782 = vpow.pop %v781
      %v783 = vmul.f32 %v746, 1.442695
      %v784 = vpow.pop %v783
      %v785 = vmul.f32 %v747, 1.442695
      %v786 = vpow.pop %v785
      %v787 = vmul.f32 %v748, 1.442695
      %v788 = vpow.pop %v787
      %v789 = vmul.f32 %v749, 1.442695
      %v790 = vpow.pop %v789
      %v791 = vmul.f32 %v750, 1.442695
      %v792 = vpow.pop %v791
      %v793 = vmul.f32 %v751, 1.442695
      %v794 = vpow.pop %v793
      %v795 = vmul.f32 %v752, 1.442695
      %v796 = vpow.pop %v795
      %v797 = vmul.f32 %v753, 1.442695
      %v798 = vpow.pop %v797
      %v799 = vmul.f32 %v754, 1.442695
      %v800 = vpow.pop %v799
      %v801 = vmul.f32 %v755, 1.442695
      %v802 = vpow.pop %v801
      %v803 = vmul.f32 %v756, 1.442695
      %v804 = vpow.pop %v803
      %v805 = vmul.f32 %v757, 1.442695
      %v806 = vpow.pop %v805
      %v807 = vmul.f32 %v758, 1.442695
      %v808 = vpow.pop %v807
      %v809 = vmul.f32 %v759, 1.442695
      %v810 = vpow.pop %v809
      %v811 = vmul.f32 %v760, 1.442695
      %v812 = vpow.pop %v811
      %v813 = vmul.f32 %v761, 1.442695
      %v814 = vpow.pop %v813
      %v815 = vmul.f32 %v762, 1.442695
      %v816 = vpow.pop %v815
      %v817 = vmul.f32 %v763, 1.442695
      %v818 = vpow.pop %v817
      %v819 = vmul.f32 %v764, 1.442695
      %v820 = vpow.pop %v819
      %v821 = vmul.f32 %v765, 1.442695
      %v822 = vpow.pop %v821
      %v823 = vmul.f32 %v766, 1.442695
      %v824 = vpow.pop %v823
      %v825 = vmul.f32 %v767, 1.442695
      %v826 = vpow.pop %v825
      %v827 = vmul.f32 %v768, 1.442695
      %v828 = vpow.pop %v827
      %v829 = vmul.f32 %v769, 1.442695
      %v830 = vpow.pop %v829
      %v831 = vmul.f32 %v770, 1.442695
      %v832 = vpow.pop %v831
      %v833 = vmul.f32 %v771, 1.442695
      %v834 = vpow.pop %v833
      %v835 = vmul.f32 %v772, 1.442695
      %v836 = vpow.pop %v835
      %v837 = vadd.f32 %v774, 1.0
      %v838 = vadd.f32 %v776, 1.0
      %v839 = vadd.f32 %v778, 1.0
      %v840 = vadd.f32 %v780, 1.0
      %v841 = vadd.f32 %v782, 1.0
      %v842 = vadd.f32 %v784, 1.0
      %v843 = vadd.f32 %v786, 1.0
      %v844 = vadd.f32 %v788, 1.0
      %v845 = vadd.f32 %v790, 1.0
      %v846 = vadd.f32 %v792, 1.0
      %v847 = vadd.f32 %v794, 1.0
      %v848 = vadd.f32 %v796, 1.0
      %v849 = vadd.f32 %v798, 1.0
      %v850 = vadd.f32 %v800, 1.0
      %v851 = vadd.f32 %v802, 1.0
      %v852 = vadd.f32 %v804, 1.0
      %v853 = vadd.f32 %v806, 1.0
      %v854 = vadd.f32 %v808, 1.0
      %v855 = vadd.f32 %v810, 1.0
      %v856 = vadd.f32 %v812, 1.0
      %v857 = vadd.f32 %v814, 1.0
      %v858 = vadd.f32 %v816, 1.0
      %v859 = vadd.f32 %v818, 1.0
      %v860 = vadd.f32 %v820, 1.0
      %v861 = vadd.f32 %v822, 1.0
      %v862 = vadd.f32 %v824, 1.0
      %v863 = vadd.f32 %v826, 1.0
      %v864 = vadd.f32 %v828, 1.0
      %v865 = vadd.f32 %v830, 1.0
      %v866 = vadd.f32 %v832, 1.0
      %v867 = vadd.f32 %v834, 1.0
      %v868 = vadd.f32 %v836, 1.0
      %v869 = vrcp.pop %v837
      %v870 = vrcp.pop %v838
      %v871 = vrcp.pop %v839
      %v872 = vrcp.pop %v840
      %v873 = vrcp.pop %v841
      %v874 = vrcp.pop %v842
      %v875 = vrcp.pop %v843
      %v876 = vrcp.pop %v844
      %v877 = vrcp.pop %v845
      %v878 = vrcp.pop %v846
      %v879 = vrcp.pop %v847
      %v880 = vrcp.pop %v848
      %v881 = vrcp.pop %v849
      %v882 = vrcp.pop %v850
      %v883 = vrcp.pop %v851
      %v884 = vrcp.pop %v852
      %v885 = vrcp.pop %v853
      %v886 = vrcp.pop %v854
      %v887 = vrcp.pop %v855
      %v888 = vrcp.pop %v856
      %v889 = vrcp.pop %v857
      %v890 = vrcp.pop %v858
      %v891 = vrcp.pop %v859
      %v892 = vrcp.pop %v860
      %v893 = vrcp.pop %v861
      %v894 = vrcp.pop %v862
      %v895 = vrcp.pop %v863
      %v896 = vrcp.pop %v864
      %v897 = vrcp.pop %v865
      %v898 = vrcp.pop %v866
      %v899 = vrcp.pop %v867
      %v900 = vrcp.pop %v868
      %v901 = vmul.f32 %v709, %v869
      %v902 = vmul.f32 %v710, %v870
      %v903 = vmul.f32 %v711, %v871
      %v904 = vmul.f32 %v712, %v872
      %v905 = vmul.f32 %v713, %v873
      %v906 = vmul.f32 %v714, %v874
      %v907 = vmul.f32 %v715, %v875
      %v908 = vmul.f32 %v716, %v876
      %v909 = vmul.f32 %v717, %v877
      %v910 = vmul.f32 %v718, %v878
      %v911 = vmul.f32 %v719, %v879
      %v912 = vmul.f32 %v720, %v880
      %v913 = vmul.f32 %v721, %v881
      %v914 = vmul.f32 %v722, %v882
      %v915 = vmul.f32 %v723, %v883
      %v916 = vmul.f32 %v724, %v884
      %v917 = vmul.f32 %v725, %v885
      %v918 = vmul.f32 %v726, %v886
      %v919 = vmul.f32 %v727, %v887
      %v920 = vmul.f32 %v728, %v888
      %v921 = vmul.f32 %v729, %v889
      %v922 = vmul.f32 %v730, %v890
      %v923 = vmul.f32 %v731, %v891
      %v924 = vmul.f32 %v732, %v892
      %v925 = vmul.f32 %v733, %v893
      %v926 = vmul.f32 %v734, %v894
      %v927 = vmul.f32 %v735, %v895
      %v928 = vmul.f32 %v736, %v896
      %v929 = vmul.f32 %v737, %v897
      %v930 = vmul.f32 %v738, %v898
      %v931 = vmul.f32 %v739, %v899
      %v932 = vmul.f32 %v740, %v900
      %s933 = scalar_lea.vmem [#allocation2], 24
      %vm934 = vcmask 15360
      %935 = vst.msk [vmem:[%s933 + $0x1] sm:$0xff] %vm934, %v901
      %936 = vst.msk [vmem:[%s933 + $0x9] sm:$0xff] %vm934, %v902
      %937 = vst.msk [vmem:[%s933 + $0x19] sm:$0xff] %vm934, %v903
      %938 = vst.msk [vmem:[%s933 + $0x21] sm:$0xff] %vm934, %v904
      %939 = vst.msk [vmem:[%s933 + $0x31] sm:$0xff] %vm934, %v905
      %940 = vst.msk [vmem:[%s933 + $0x39] sm:$0xff] %vm934, %v906
      %941 = vst.msk [vmem:[%s933 + $0x49] sm:$0xff] %vm934, %v907
      %942 = vst.msk [vmem:[%s933 + $0x51] sm:$0xff] %vm934, %v908
      %943 = vst.msk [vmem:[%s933 + $0x61] sm:$0xff] %vm934, %v909
      %944 = vst.msk [vmem:[%s933 + $0x69] sm:$0xff] %vm934, %v910
      %945 = vst.msk [vmem:[%s933 + $0x79] sm:$0xff] %vm934, %v911
      %946 = vst.msk [vmem:[%s933 + $0x81] sm:$0xff] %vm934, %v912
      %947 = vst.msk [vmem:[%s933 + $0x91] sm:$0xff] %vm934, %v913
      %948 = vst.msk [vmem:[%s933 + $0x99] sm:$0xff] %vm934, %v914
      %949 = vst.msk [vmem:[%s933 + $0xa9] sm:$0xff] %vm934, %v915
      %950 = vst.msk [vmem:[%s933 + $0xb1] sm:$0xff] %vm934, %v916
      %951 = vst.msk [vmem:[%s933 + $0xc1] sm:$0xff] %vm934, %v917
      %952 = vst.msk [vmem:[%s933 + $0xc9] sm:$0xff] %vm934, %v918
      %953 = vst.msk [vmem:[%s933 + $0xd9] sm:$0xff] %vm934, %v919
      %954 = vst.msk [vmem:[%s933 + $0xe1] sm:$0xff] %vm934, %v920
      %955 = vst.msk [vmem:[%s933 + $0xf1] sm:$0xff] %vm934, %v921
      %956 = vst.msk [vmem:[%s933 + $0xf9] sm:$0xff] %vm934, %v922
      %957 = vst.msk [vmem:[%s933 + $0x109] sm:$0xff] %vm934, %v923
      %958 = vst.msk [vmem:[%s933 + $0x111] sm:$0xff] %vm934, %v924
      %959 = vst.msk [vmem:[%s933 + $0x121] sm:$0xff] %vm934, %v925
      %960 = vst.msk [vmem:[%s933 + $0x129] sm:$0xff] %vm934, %v926
      %961 = vst.msk [vmem:[%s933 + $0x139] sm:$0xff] %vm934, %v927
      %962 = vst.msk [vmem:[%s933 + $0x141] sm:$0xff] %vm934, %v928
      %963 = vst.msk [vmem:[%s933 + $0x151] sm:$0xff] %vm934, %v929
      %964 = vst.msk [vmem:[%s933 + $0x159] sm:$0xff] %vm934, %v930
      %965 = vst.msk [vmem:[%s933 + $0x169] sm:$0xff] %vm934, %v931
      %966 = vst.msk [vmem:[%s933 + $0x171] sm:$0xff] %vm934, %v932
      %vm967 = vcmask 8192
      %968 = vst.msk [vmem:[#allocation2] sm:$0x1] %vm967, 0.0
      %969 = vst.msk [vmem:[#allocation2 + $0x18] sm:$0x1] %vm967, 0.0
      %970 = vst.msk [vmem:[#allocation2 + $0x30] sm:$0x1] %vm967, 0.0
      %971 = vst.msk [vmem:[#allocation2 + $0x48] sm:$0x1] %vm967, 0.0
      %972 = vst.msk [vmem:[#allocation2 + $0x60] sm:$0x1] %vm967, 0.0
      %973 = vst.msk [vmem:[#allocation2 + $0x78] sm:$0x1] %vm967, 0.0
      %974 = vst.msk [vmem:[#allocation2 + $0x90] sm:$0x1] %vm967, 0.0
      %975 = vst.msk [vmem:[#allocation2 + $0xa8] sm:$0x1] %vm967, 0.0
      %976 = vst.msk [vmem:[#allocation2 + $0xc0] sm:$0x1] %vm967, 0.0
      %977 = vst.msk [vmem:[#allocation2 + $0xd8] sm:$0x1] %vm967, 0.0
      %978 = vst.msk [vmem:[#allocation2 + $0xf0] sm:$0x1] %vm967, 0.0
      %979 = vst.msk [vmem:[#allocation2 + $0x108] sm:$0x1] %vm967, 0.0
      %980 = vst.msk [vmem:[#allocation2 + $0x120] sm:$0x1] %vm967, 0.0
      %981 = vst.msk [vmem:[#allocation2 + $0x138] sm:$0x1] %vm967, 0.0
      %982 = vst.msk [vmem:[#allocation2 + $0x150] sm:$0x1] %vm967, 0.0
      %983 = vst.msk [vmem:[#allocation2 + $0x168] sm:$0x1] %vm967, 0.0
      %984 = vst.msk [vmem:[#allocation2 + $0x180] sm:$0x1] %vm967, 0.0
      %985 = vst.msk [vmem:[#allocation2 + $0x198] sm:$0x1] %vm967, 0.0
      %986 = vst.msk [vmem:[#allocation2 + $0x11] sm:$0x1] %vm967, 0.0
      %987 = vst.msk [vmem:[#allocation2 + $0x29] sm:$0x1] %vm967, 0.0
      %988 = vst.msk [vmem:[#allocation2 + $0x41] sm:$0x1] %vm967, 0.0
      %989 = vst.msk [vmem:[#allocation2 + $0x59] sm:$0x1] %vm967, 0.0
      %990 = vst.msk [vmem:[#allocation2 + $0x71] sm:$0x1] %vm967, 0.0
      %991 = vst.msk [vmem:[#allocation2 + $0x89] sm:$0x1] %vm967, 0.0
      %992 = vst.msk [vmem:[#allocation2 + $0xa1] sm:$0x1] %vm967, 0.0
      %993 = vst.msk [vmem:[#allocation2 + $0xb9] sm:$0x1] %vm967, 0.0
      %994 = vst.msk [vmem:[#allocation2 + $0xd1] sm:$0x1] %vm967, 0.0
      %995 = vst.msk [vmem:[#allocation2 + $0xe9] sm:$0x1] %vm967, 0.0
      %996 = vst.msk [vmem:[#allocation2 + $0x101] sm:$0x1] %vm967, 0.0
      %997 = vst.msk [vmem:[#allocation2 + $0x119] sm:$0x1] %vm967, 0.0
      %998 = vst.msk [vmem:[#allocation2 + $0x131] sm:$0x1] %vm967, 0.0
      %999 = vst.msk [vmem:[#allocation2 + $0x149] sm:$0x1] %vm967, 0.0
      %1000 = vst.msk [vmem:[#allocation2 + $0x161] sm:$0x1] %vm967, 0.0
      %1001 = vst.msk [vmem:[#allocation2 + $0x179] sm:$0x1] %vm967, 0.0
      %1002 = vst.msk [vmem:[#allocation2 + $0x191] sm:$0x1] %vm967, 0.0
      %1003 = vst.msk [vmem:[#allocation2 + $0x1a9] sm:$0x1] %vm967, 0.0
      %1004 = vst.msk [vmem:[#allocation2] sm:$0xff] %vm934, 0.0
      %1005 = vst.msk [vmem:[#allocation2 + $0x8] sm:$0xff] %vm934, 0.0
      %vm1006 = vcmask 9216
      %1007 = vst.msk [vmem:[#allocation2 + $0x10] sm:$0x3] %vm1006, 0.0
      %s1008 = scalar_lea.vmem [#allocation2], 408
      %1009 = vst.msk [vmem:[%s1008] sm:$0xff] %vm934, 0.0
      %1010 = vst.msk [vmem:[%s1008 + $0x8] sm:$0xff] %vm934, 0.0
      %1011 = vst.msk [vmem:[%s1008 + $0x10] sm:$0x3] %vm1006, 0.0
      %v1012 = vld [vmem:[#allocation2] sm:$0xff]
      %v1013 = vld [vmem:[#allocation2 + $0x8] sm:$0xff]
      %v1014 = vld [vmem:[#allocation2 + $0x10] sm:$0x3]
      %v1015 = vld [vmem:[#allocation2 + $0x18] sm:$0xff]
      %v1016 = vld [vmem:[#allocation2 + $0x20] sm:$0xff]
      %v1017 = vld [vmem:[#allocation2 + $0x28] sm:$0x3]
      %v1018 = vld [vmem:[#allocation2 + $0x30] sm:$0xff]
      %v1019 = vld [vmem:[#allocation2 + $0x38] sm:$0xff]
      %v1020 = vld [vmem:[#allocation2 + $0x40] sm:$0x3]
      %v1021 = vld [vmem:[#allocation2 + $0x48] sm:$0xff]
      %v1022 = vld [vmem:[#allocation2 + $0x50] sm:$0xff]
      %v1023 = vld [vmem:[#allocation2 + $0x58] sm:$0x3]
      %v1024 = vld [vmem:[#allocation2 + $0x60] sm:$0xff]
      %v1025 = vld [vmem:[#allocation2 + $0x68] sm:$0xff]
      %v1026 = vld [vmem:[#allocation2 + $0x70] sm:$0x3]
      %v1027 = vld [vmem:[#allocation2 + $0x78] sm:$0xff]
      %v1028 = vld [vmem:[#allocation2 + $0x80] sm:$0xff]
      %v1029 = vld [vmem:[#allocation2 + $0x88] sm:$0x3]
      %v1030 = vld [vmem:[#allocation2 + $0x90] sm:$0xff]
      %v1031 = vld [vmem:[#allocation2 + $0x98] sm:$0xff]
      %v1032 = vld [vmem:[#allocation2 + $0xa0] sm:$0x3]
      %v1033 = vld [vmem:[#allocation2 + $0xa8] sm:$0xff]
      %v1034 = vld [vmem:[#allocation2 + $0xb0] sm:$0xff]
      %v1035 = vld [vmem:[#allocation2 + $0xb8] sm:$0x3]
      %v1036 = vld [vmem:[#allocation2 + $0xc0] sm:$0xff]
      %v1037 = vld [vmem:[#allocation2 + $0xc8] sm:$0xff]
      %v1038 = vld [vmem:[#allocation2 + $0xd0] sm:$0x3]
      %v1039 = vld [vmem:[#allocation2 + $0xd8] sm:$0xff]
      %v1040 = vld [vmem:[#allocation2 + $0xe0] sm:$0xff]
      %v1041 = vld [vmem:[#allocation2 + $0xe8] sm:$0x3]
      %v1042 = vld [vmem:[#allocation2 + $0xf0] sm:$0xff]
      %v1043 = vld [vmem:[#allocation2 + $0xf8] sm:$0xff]
      %v1044 = vld [vmem:[#allocation2 + $0x100] sm:$0x3]
      %v1045 = vld [vmem:[#allocation2 + $0x108] sm:$0xff]
      %v1046 = vld [vmem:[#allocation2 + $0x110] sm:$0xff]
      %v1047 = vld [vmem:[#allocation2 + $0x118] sm:$0x3]
      %v1048 = vld [vmem:[#allocation2 + $0x120] sm:$0xff]
      %v1049 = vld [vmem:[#allocation2 + $0x128] sm:$0xff]
      %v1050 = vld [vmem:[#allocation2 + $0x130] sm:$0x3]
      %v1051 = vld [vmem:[#allocation2 + $0x138] sm:$0xff]
      %v1052 = vld [vmem:[#allocation2 + $0x140] sm:$0xff]
      %v1053 = vld [vmem:[#allocation2 + $0x148] sm:$0x3]
      %v1054 = vld [vmem:[#allocation2 + $0x150] sm:$0xff]
      %v1055 = vld [vmem:[#allocation2 + $0x158] sm:$0xff]
      %v1056 = vld [vmem:[#allocation2 + $0x160] sm:$0x3]
      %v1057 = vld [vmem:[#allocation2 + $0x168] sm:$0xff]
      %v1058 = vld [vmem:[#allocation2 + $0x170] sm:$0xff]
      %v1059 = vld [vmem:[#allocation2 + $0x178] sm:$0x3]
      %v1060 = vld [vmem:[%s933] sm:$0xff]
      %v1061 = vld [vmem:[%s933 + $0x8] sm:$0xff]
      %v1062 = vld [vmem:[%s933 + $0x10] sm:$0x3]
      %v1063 = vld [vmem:[%s933 + $0x18] sm:$0xff]
      %v1064 = vld [vmem:[%s933 + $0x20] sm:$0xff]
      %v1065 = vld [vmem:[%s933 + $0x28] sm:$0x3]
      %v1066 = vld [vmem:[%s933 + $0x30] sm:$0xff]
      %v1067 = vld [vmem:[%s933 + $0x38] sm:$0xff]
      %v1068 = vld [vmem:[%s933 + $0x40] sm:$0x3]
      %v1069 = vld [vmem:[%s933 + $0x48] sm:$0xff]
      %v1070 = vld [vmem:[%s933 + $0x50] sm:$0xff]
      %v1071 = vld [vmem:[%s933 + $0x58] sm:$0x3]
      %v1072 = vld [vmem:[%s933 + $0x60] sm:$0xff]
      %v1073 = vld [vmem:[%s933 + $0x68] sm:$0xff]
      %v1074 = vld [vmem:[%s933 + $0x70] sm:$0x3]
      %v1075 = vld [vmem:[%s933 + $0x78] sm:$0xff]
      %v1076 = vld [vmem:[%s933 + $0x80] sm:$0xff]
      %v1077 = vld [vmem:[%s933 + $0x88] sm:$0x3]
      %v1078 = vld [vmem:[%s933 + $0x90] sm:$0xff]
      %v1079 = vld [vmem:[%s933 + $0x98] sm:$0xff]
      %v1080 = vld [vmem:[%s933 + $0xa0] sm:$0x3]
      %v1081 = vld [vmem:[%s933 + $0xa8] sm:$0xff]
      %v1082 = vld [vmem:[%s933 + $0xb0] sm:$0xff]
      %v1083 = vld [vmem:[%s933 + $0xb8] sm:$0x3]
      %v1084 = vld [vmem:[%s933 + $0xc0] sm:$0xff]
      %v1085 = vld [vmem:[%s933 + $0xc8] sm:$0xff]
      %v1086 = vld [vmem:[%s933 + $0xd0] sm:$0x3]
      %v1087 = vld [vmem:[%s933 + $0xd8] sm:$0xff]
      %v1088 = vld [vmem:[%s933 + $0xe0] sm:$0xff]
      %v1089 = vld [vmem:[%s933 + $0xe8] sm:$0x3]
      %v1090 = vld [vmem:[%s933 + $0xf0] sm:$0xff]
      %v1091 = vld [vmem:[%s933 + $0xf8] sm:$0xff]
      %v1092 = vld [vmem:[%s933 + $0x100] sm:$0x3]
      %v1093 = vld [vmem:[%s933 + $0x108] sm:$0xff]
      %v1094 = vld [vmem:[%s933 + $0x110] sm:$0xff]
      %v1095 = vld [vmem:[%s933 + $0x118] sm:$0x3]
      %v1096 = vld [vmem:[%s933 + $0x120] sm:$0xff]
      %v1097 = vld [vmem:[%s933 + $0x128] sm:$0xff]
      %v1098 = vld [vmem:[%s933 + $0x130] sm:$0x3]
      %v1099 = vld [vmem:[%s933 + $0x138] sm:$0xff]
      %v1100 = vld [vmem:[%s933 + $0x140] sm:$0xff]
      %v1101 = vld [vmem:[%s933 + $0x148] sm:$0x3]
      %v1102 = vld [vmem:[%s933 + $0x150] sm:$0xff]
      %v1103 = vld [vmem:[%s933 + $0x158] sm:$0xff]
      %v1104 = vld [vmem:[%s933 + $0x160] sm:$0x3]
      %v1105 = vld [vmem:[%s933 + $0x168] sm:$0xff]
      %v1106 = vld [vmem:[%s933 + $0x170] sm:$0xff]
      %v1107 = vld [vmem:[%s933 + $0x178] sm:$0x3]
      %s1108 = scalar_lea.vmem [#allocation2], 48
      %v1109 = vld [vmem:[%s1108] sm:$0xff]
      %v1110 = vld [vmem:[%s1108 + $0x8] sm:$0xff]
      %v1111 = vld [vmem:[%s1108 + $0x10] sm:$0x3]
      %v1112 = vld [vmem:[%s1108 + $0x18] sm:$0xff]
      %v1113 = vld [vmem:[%s1108 + $0x20] sm:$0xff]
      %v1114 = vld [vmem:[%s1108 + $0x28] sm:$0x3]
      %v1115 = vld [vmem:[%s1108 + $0x30] sm:$0xff]
      %v1116 = vld [vmem:[%s1108 + $0x38] sm:$0xff]
      %v1117 = vld [vmem:[%s1108 + $0x40] sm:$0x3]
      %v1118 = vld [vmem:[%s1108 + $0x48] sm:$0xff]
      %v1119 = vld [vmem:[%s1108 + $0x50] sm:$0xff]
      %v1120 = vld [vmem:[%s1108 + $0x58] sm:$0x3]
      %v1121 = vld [vmem:[%s1108 + $0x60] sm:$0xff]
      %v1122 = vld [vmem:[%s1108 + $0x68] sm:$0xff]
      %v1123 = vld [vmem:[%s1108 + $0x70] sm:$0x3]
      %v1124 = vld [vmem:[%s1108 + $0x78] sm:$0xff]
      %v1125 = vld [vmem:[%s1108 + $0x80] sm:$0xff]
      %v1126 = vld [vmem:[%s1108 + $0x88] sm:$0x3]
      %v1127 = vld [vmem:[%s1108 + $0x90] sm:$0xff]
      %v1128 = vld [vmem:[%s1108 + $0x98] sm:$0xff]
      %v1129 = vld [vmem:[%s1108 + $0xa0] sm:$0x3]
      %v1130 = vld [vmem:[%s1108 + $0xa8] sm:$0xff]
      %v1131 = vld [vmem:[%s1108 + $0xb0] sm:$0xff]
      %v1132 = vld [vmem:[%s1108 + $0xb8] sm:$0x3]
      %v1133 = vld [vmem:[%s1108 + $0xc0] sm:$0xff]
      %v1134 = vld [vmem:[%s1108 + $0xc8] sm:$0xff]
      %v1135 = vld [vmem:[%s1108 + $0xd0] sm:$0x3]
      %v1136 = vld [vmem:[%s1108 + $0xd8] sm:$0xff]
      %v1137 = vld [vmem:[%s1108 + $0xe0] sm:$0xff]
      %v1138 = vld [vmem:[%s1108 + $0xe8] sm:$0x3]
      %v1139 = vld [vmem:[%s1108 + $0xf0] sm:$0xff]
      %v1140 = vld [vmem:[%s1108 + $0xf8] sm:$0xff]
      %v1141 = vld [vmem:[%s1108 + $0x100] sm:$0x3]
      %v1142 = vld [vmem:[%s1108 + $0x108] sm:$0xff]
      %v1143 = vld [vmem:[%s1108 + $0x110] sm:$0xff]
      %v1144 = vld [vmem:[%s1108 + $0x118] sm:$0x3]
      %v1145 = vld [vmem:[%s1108 + $0x120] sm:$0xff]
      %v1146 = vld [vmem:[%s1108 + $0x128] sm:$0xff]
      %v1147 = vld [vmem:[%s1108 + $0x130] sm:$0x3]
      %v1148 = vld [vmem:[%s1108 + $0x138] sm:$0xff]
      %v1149 = vld [vmem:[%s1108 + $0x140] sm:$0xff]
      %v1150 = vld [vmem:[%s1108 + $0x148] sm:$0x3]
      %v1151 = vld [vmem:[%s1108 + $0x150] sm:$0xff]
      %v1152 = vld [vmem:[%s1108 + $0x158] sm:$0xff]
      %v1153 = vld [vmem:[%s1108 + $0x160] sm:$0x3]
      %v1154 = vld [vmem:[%s1108 + $0x168] sm:$0xff]
      %v1155 = vld [vmem:[%s1108 + $0x170] sm:$0xff]
      %v1156 = vld [vmem:[%s1108 + $0x178] sm:$0x3]
      %1205 = vrot.lane.b32.xlu0 %v1060, 2
      %v1206 = vpop.permute.xlu0 %1205
      %1207 = vrot.lane.b32.xlu0 %v1061, 2
      %v1208 = vpop.permute.xlu0 %1207
      %1209 = vrot.lane.b32.xlu0 %v1062, 2
      %v1210 = vpop.permute.xlu0 %1209
      %1211 = vrot.lane.b32.xlu0 %v1063, 2
      %v1212 = vpop.permute.xlu0 %1211
      %1213 = vrot.lane.b32.xlu0 %v1064, 2
      %v1214 = vpop.permute.xlu0 %1213
      %1215 = vrot.lane.b32.xlu0 %v1065, 2
      %v1216 = vpop.permute.xlu0 %1215
      %1217 = vrot.lane.b32.xlu0 %v1066, 2
      %v1218 = vpop.permute.xlu0 %1217
      %1219 = vrot.lane.b32.xlu0 %v1067, 2
      %v1220 = vpop.permute.xlu0 %1219
      %1221 = vrot.lane.b32.xlu0 %v1068, 2
      %v1222 = vpop.permute.xlu0 %1221
      %1223 = vrot.lane.b32.xlu0 %v1069, 2
      %v1224 = vpop.permute.xlu0 %1223
      %1225 = vrot.lane.b32.xlu0 %v1070, 2
      %v1226 = vpop.permute.xlu0 %1225
      %1227 = vrot.lane.b32.xlu0 %v1071, 2
      %v1228 = vpop.permute.xlu0 %1227
      %1229 = vrot.lane.b32.xlu0 %v1072, 2
      %v1230 = vpop.permute.xlu0 %1229
      %1231 = vrot.lane.b32.xlu0 %v1073, 2
      %v1232 = vpop.permute.xlu0 %1231
      %1233 = vrot.lane.b32.xlu0 %v1074, 2
      %v1234 = vpop.permute.xlu0 %1233
      %1235 = vrot.lane.b32.xlu0 %v1075, 2
      %v1236 = vpop.permute.xlu0 %1235
      %1237 = vrot.lane.b32.xlu0 %v1076, 2
      %v1238 = vpop.permute.xlu0 %1237
      %1239 = vrot.lane.b32.xlu0 %v1077, 2
      %v1240 = vpop.permute.xlu0 %1239
      %1241 = vrot.lane.b32.xlu0 %v1078, 2
      %v1242 = vpop.permute.xlu0 %1241
      %1243 = vrot.lane.b32.xlu0 %v1079, 2
      %v1244 = vpop.permute.xlu0 %1243
      %1245 = vrot.lane.b32.xlu0 %v1080, 2
      %v1246 = vpop.permute.xlu0 %1245
      %1247 = vrot.lane.b32.xlu0 %v1081, 2
      %v1248 = vpop.permute.xlu0 %1247
      %1249 = vrot.lane.b32.xlu0 %v1082, 2
      %v1250 = vpop.permute.xlu0 %1249
      %1251 = vrot.lane.b32.xlu0 %v1083, 2
      %v1252 = vpop.permute.xlu0 %1251
      %1253 = vrot.lane.b32.xlu0 %v1084, 2
      %v1254 = vpop.permute.xlu0 %1253
      %1255 = vrot.lane.b32.xlu0 %v1085, 2
      %v1256 = vpop.permute.xlu0 %1255
      %1257 = vrot.lane.b32.xlu0 %v1086, 2
      %v1258 = vpop.permute.xlu0 %1257
      %1259 = vrot.lane.b32.xlu0 %v1087, 2
      %v1260 = vpop.permute.xlu0 %1259
      %1261 = vrot.lane.b32.xlu0 %v1088, 2
      %v1262 = vpop.permute.xlu0 %1261
      %1263 = vrot.lane.b32.xlu0 %v1089, 2
      %v1264 = vpop.permute.xlu0 %1263
      %1265 = vrot.lane.b32.xlu0 %v1090, 2
      %v1266 = vpop.permute.xlu0 %1265
      %1267 = vrot.lane.b32.xlu0 %v1091, 2
      %v1268 = vpop.permute.xlu0 %1267
      %1269 = vrot.lane.b32.xlu0 %v1092, 2
      %v1270 = vpop.permute.xlu0 %1269
      %1271 = vrot.lane.b32.xlu0 %v1093, 2
      %v1272 = vpop.permute.xlu0 %1271
      %1273 = vrot.lane.b32.xlu0 %v1094, 2
      %v1274 = vpop.permute.xlu0 %1273
      %1275 = vrot.lane.b32.xlu0 %v1095, 2
      %v1276 = vpop.permute.xlu0 %1275
      %1277 = vrot.lane.b32.xlu0 %v1096, 2
      %v1278 = vpop.permute.xlu0 %1277
      %1279 = vrot.lane.b32.xlu0 %v1097, 2
      %v1280 = vpop.permute.xlu0 %1279
      %1281 = vrot.lane.b32.xlu0 %v1098, 2
      %v1282 = vpop.permute.xlu0 %1281
      %1283 = vrot.lane.b32.xlu0 %v1099, 2
      %v1284 = vpop.permute.xlu0 %1283
      %1285 = vrot.lane.b32.xlu0 %v1100, 2
      %v1286 = vpop.permute.xlu0 %1285
      %1287 = vrot.lane.b32.xlu0 %v1101, 2
      %v1288 = vpop.permute.xlu0 %1287
      %1289 = vrot.lane.b32.xlu0 %v1102, 2
      %v1290 = vpop.permute.xlu0 %1289
      %1291 = vrot.lane.b32.xlu0 %v1103, 2
      %v1292 = vpop.permute.xlu0 %1291
      %1293 = vrot.lane.b32.xlu0 %v1104, 2
      %v1294 = vpop.permute.xlu0 %1293
      %1295 = vrot.lane.b32.xlu0 %v1105, 2
      %v1296 = vpop.permute.xlu0 %1295
      %1297 = vrot.lane.b32.xlu0 %v1106, 2
      %v1298 = vpop.permute.xlu0 %1297
      %1299 = vrot.lane.b32.xlu0 %v1107, 2
      %v1300 = vpop.permute.xlu0 %1299
      %1397 = vrot.lane.b32.xlu0 %v1109, 4
      %v1398 = vpop.permute.xlu0 %1397
      %1399 = vrot.lane.b32.xlu0 %v1110, 4
      %v1400 = vpop.permute.xlu0 %1399
      %1401 = vrot.lane.b32.xlu0 %v1111, 4
      %v1402 = vpop.permute.xlu0 %1401
      %1403 = vrot.lane.b32.xlu0 %v1112, 4
      %v1404 = vpop.permute.xlu0 %1403
      %1405 = vrot.lane.b32.xlu0 %v1113, 4
      %v1406 = vpop.permute.xlu0 %1405
      %1407 = vrot.lane.b32.xlu0 %v1114, 4
      %v1408 = vpop.permute.xlu0 %1407
      %1409 = vrot.lane.b32.xlu0 %v1115, 4
      %v1410 = vpop.permute.xlu0 %1409
      %1411 = vrot.lane.b32.xlu0 %v1116, 4
      %v1412 = vpop.permute.xlu0 %1411
      %1413 = vrot.lane.b32.xlu0 %v1117, 4
      %v1414 = vpop.permute.xlu0 %1413
      %1415 = vrot.lane.b32.xlu0 %v1118, 4
      %v1416 = vpop.permute.xlu0 %1415
      %1417 = vrot.lane.b32.xlu0 %v1119, 4
      %v1418 = vpop.permute.xlu0 %1417
      %1419 = vrot.lane.b32.xlu0 %v1120, 4
      %v1420 = vpop.permute.xlu0 %1419
      %1421 = vrot.lane.b32.xlu0 %v1121, 4
      %v1422 = vpop.permute.xlu0 %1421
      %1423 = vrot.lane.b32.xlu0 %v1122, 4
      %v1424 = vpop.permute.xlu0 %1423
      %1425 = vrot.lane.b32.xlu0 %v1123, 4
      %v1426 = vpop.permute.xlu0 %1425
      %1427 = vrot.lane.b32.xlu0 %v1124, 4
      %v1428 = vpop.permute.xlu0 %1427
      %1429 = vrot.lane.b32.xlu0 %v1125, 4
      %v1430 = vpop.permute.xlu0 %1429
      %1431 = vrot.lane.b32.xlu0 %v1126, 4
      %v1432 = vpop.permute.xlu0 %1431
      %1433 = vrot.lane.b32.xlu0 %v1127, 4
      %v1434 = vpop.permute.xlu0 %1433
      %1435 = vrot.lane.b32.xlu0 %v1128, 4
      %v1436 = vpop.permute.xlu0 %1435
      %1437 = vrot.lane.b32.xlu0 %v1129, 4
      %v1438 = vpop.permute.xlu0 %1437
      %1439 = vrot.lane.b32.xlu0 %v1130, 4
      %v1440 = vpop.permute.xlu0 %1439
      %1441 = vrot.lane.b32.xlu0 %v1131, 4
      %v1442 = vpop.permute.xlu0 %1441
      %1443 = vrot.lane.b32.xlu0 %v1132, 4
      %v1444 = vpop.permute.xlu0 %1443
      %1445 = vrot.lane.b32.xlu0 %v1133, 4
      %v1446 = vpop.permute.xlu0 %1445
      %1447 = vrot.lane.b32.xlu0 %v1134, 4
      %v1448 = vpop.permute.xlu0 %1447
      %1449 = vrot.lane.b32.xlu0 %v1135, 4
      %v1450 = vpop.permute.xlu0 %1449
      %1451 = vrot.lane.b32.xlu0 %v1136, 4
      %v1452 = vpop.permute.xlu0 %1451
      %1453 = vrot.lane.b32.xlu0 %v1137, 4
      %v1454 = vpop.permute.xlu0 %1453
      %1455 = vrot.lane.b32.xlu0 %v1138, 4
      %v1456 = vpop.permute.xlu0 %1455
      %1457 = vrot.lane.b32.xlu0 %v1139, 4
      %v1458 = vpop.permute.xlu0 %1457
      %1459 = vrot.lane.b32.xlu0 %v1140, 4
      %v1460 = vpop.permute.xlu0 %1459
      %1461 = vrot.lane.b32.xlu0 %v1141, 4
      %v1462 = vpop.permute.xlu0 %1461
      %1463 = vrot.lane.b32.xlu0 %v1142, 4
      %v1464 = vpop.permute.xlu0 %1463
      %1465 = vrot.lane.b32.xlu0 %v1143, 4
      %v1466 = vpop.permute.xlu0 %1465
      %1467 = vrot.lane.b32.xlu0 %v1144, 4
      %v1468 = vpop.permute.xlu0 %1467
      %1469 = vrot.lane.b32.xlu0 %v1145, 4
      %v1470 = vpop.permute.xlu0 %1469
      %1471 = vrot.lane.b32.xlu0 %v1146, 4
      %v1472 = vpop.permute.xlu0 %1471
      %1473 = vrot.lane.b32.xlu0 %v1147, 4
      %v1474 = vpop.permute.xlu0 %1473
      %1475 = vrot.lane.b32.xlu0 %v1148, 4
      %v1476 = vpop.permute.xlu0 %1475
      %1477 = vrot.lane.b32.xlu0 %v1149, 4
      %v1478 = vpop.permute.xlu0 %1477
      %1479 = vrot.lane.b32.xlu0 %v1150, 4
      %v1480 = vpop.permute.xlu0 %1479
      %1481 = vrot.lane.b32.xlu0 %v1151, 4
      %v1482 = vpop.permute.xlu0 %1481
      %1483 = vrot.lane.b32.xlu0 %v1152, 4
      %v1484 = vpop.permute.xlu0 %1483
      %1485 = vrot.lane.b32.xlu0 %v1153, 4
      %v1486 = vpop.permute.xlu0 %1485
      %1487 = vrot.lane.b32.xlu0 %v1154, 4
      %v1488 = vpop.permute.xlu0 %1487
      %1489 = vrot.lane.b32.xlu0 %v1155, 4
      %v1490 = vpop.permute.xlu0 %1489
      %1491 = vrot.lane.b32.xlu0 %v1156, 4
      %v1492 = vpop.permute.xlu0 %1491
      %v1541 = vsel %vm934, %v1012, %v1206
      %v1542 = vsel %vm934, %v1013, %v1208
      %v1543 = vsel %vm934, %v1014, %v1210
      %v1544 = vsel %vm934, %v1015, %v1212
      %v1545 = vsel %vm934, %v1016, %v1214
      %v1546 = vsel %vm934, %v1017, %v1216
      %v1547 = vsel %vm934, %v1018, %v1218
      %v1548 = vsel %vm934, %v1019, %v1220
      %v1549 = vsel %vm934, %v1020, %v1222
      %v1550 = vsel %vm934, %v1021, %v1224
      %v1551 = vsel %vm934, %v1022, %v1226
      %v1552 = vsel %vm934, %v1023, %v1228
      %v1553 = vsel %vm934, %v1024, %v1230
      %v1554 = vsel %vm934, %v1025, %v1232
      %v1555 = vsel %vm934, %v1026, %v1234
      %v1556 = vsel %vm934, %v1027, %v1236
      %v1557 = vsel %vm934, %v1028, %v1238
      %v1558 = vsel %vm934, %v1029, %v1240
      %v1559 = vsel %vm934, %v1030, %v1242
      %v1560 = vsel %vm934, %v1031, %v1244
      %v1561 = vsel %vm934, %v1032, %v1246
      %v1562 = vsel %vm934, %v1033, %v1248
      %v1563 = vsel %vm934, %v1034, %v1250
      %v1564 = vsel %vm934, %v1035, %v1252
      %v1565 = vsel %vm934, %v1036, %v1254
      %v1566 = vsel %vm934, %v1037, %v1256
      %v1567 = vsel %vm934, %v1038, %v1258
      %v1568 = vsel %vm934, %v1039, %v1260
      %v1569 = vsel %vm934, %v1040, %v1262
      %v1570 = vsel %vm934, %v1041, %v1264
      %v1571 = vsel %vm934, %v1042, %v1266
      %v1572 = vsel %vm934, %v1043, %v1268
      %v1573 = vsel %vm934, %v1044, %v1270
      %v1574 = vsel %vm934, %v1045, %v1272
      %v1575 = vsel %vm934, %v1046, %v1274
      %v1576 = vsel %vm934, %v1047, %v1276
      %v1577 = vsel %vm934, %v1048, %v1278
      %v1578 = vsel %vm934, %v1049, %v1280
      %v1579 = vsel %vm934, %v1050, %v1282
      %v1580 = vsel %vm934, %v1051, %v1284
      %v1581 = vsel %vm934, %v1052, %v1286
      %v1582 = vsel %vm934, %v1053, %v1288
      %v1583 = vsel %vm934, %v1054, %v1290
      %v1584 = vsel %vm934, %v1055, %v1292
      %v1585 = vsel %vm934, %v1056, %v1294
      %v1586 = vsel %vm934, %v1057, %v1296
      %v1587 = vsel %vm934, %v1058, %v1298
      %v1588 = vsel %vm934, %v1059, %v1300
      %v1589 = vsel %vm337, %v1541, %v1398
      %v1590 = vsel %vm337, %v1542, %v1400
      %v1591 = vsel %vm337, %v1543, %v1402
      %v1592 = vsel %vm337, %v1544, %v1404
      %v1593 = vsel %vm337, %v1545, %v1406
      %v1594 = vsel %vm337, %v1546, %v1408
      %v1595 = vsel %vm337, %v1547, %v1410
      %v1596 = vsel %vm337, %v1548, %v1412
      %v1597 = vsel %vm337, %v1549, %v1414
      %v1598 = vsel %vm337, %v1550, %v1416
      %v1599 = vsel %vm337, %v1551, %v1418
      %v1600 = vsel %vm337, %v1552, %v1420
      %v1601 = vsel %vm337, %v1553, %v1422
      %v1602 = vsel %vm337, %v1554, %v1424
      %v1603 = vsel %vm337, %v1555, %v1426
      %v1604 = vsel %vm337, %v1556, %v1428
      %v1605 = vsel %vm337, %v1557, %v1430
      %v1606 = vsel %vm337, %v1558, %v1432
      %v1607 = vsel %vm337, %v1559, %v1434
      %v1608 = vsel %vm337, %v1560, %v1436
      %v1609 = vsel %vm337, %v1561, %v1438
      %v1610 = vsel %vm337, %v1562, %v1440
      %v1611 = vsel %vm337, %v1563, %v1442
      %v1612 = vsel %vm337, %v1564, %v1444
      %v1613 = vsel %vm337, %v1565, %v1446
      %v1614 = vsel %vm337, %v1566, %v1448
      %v1615 = vsel %vm337, %v1567, %v1450
      %v1616 = vsel %vm337, %v1568, %v1452
      %v1617 = vsel %vm337, %v1569, %v1454
      %v1618 = vsel %vm337, %v1570, %v1456
      %v1619 = vsel %vm337, %v1571, %v1458
      %v1620 = vsel %vm337, %v1572, %v1460
      %v1621 = vsel %vm337, %v1573, %v1462
      %v1622 = vsel %vm337, %v1574, %v1464
      %v1623 = vsel %vm337, %v1575, %v1466
      %v1624 = vsel %vm337, %v1576, %v1468
      %v1625 = vsel %vm337, %v1577, %v1470
      %v1626 = vsel %vm337, %v1578, %v1472
      %v1627 = vsel %vm337, %v1579, %v1474
      %v1628 = vsel %vm337, %v1580, %v1476
      %v1629 = vsel %vm337, %v1581, %v1478
      %v1630 = vsel %vm337, %v1582, %v1480
      %v1631 = vsel %vm337, %v1583, %v1482
      %v1632 = vsel %vm337, %v1584, %v1484
      %v1633 = vsel %vm337, %v1585, %v1486
      %v1634 = vsel %vm337, %v1586, %v1488
      %v1635 = vsel %vm337, %v1587, %v1490
      %v1636 = vsel %vm337, %v1588, %v1492
      %v1637 = vld [vmem:[%s2] sm:$0x3f]
      %vm1686 = vcmask 1046528
      %v1687 = vrot.slane %v1589, 1
      %v1688 = vrot.slane %v1590, 1
      %v1689 = vsel %vm1686, %v1687, %v1688
      %v1690 = vrot.slane %v1591, 1
      %v1691 = vsel %vm1686, %v1688, %v1690
      %v1692 = vrot.slane %v1592, 1
      %v1693 = vrot.slane %v1593, 1
      %v1694 = vsel %vm1686, %v1692, %v1693
      %v1695 = vrot.slane %v1594, 1
      %v1696 = vsel %vm1686, %v1693, %v1695
      %v1697 = vrot.slane %v1595, 1
      %v1698 = vrot.slane %v1596, 1
      %v1699 = vsel %vm1686, %v1697, %v1698
      %v1700 = vrot.slane %v1597, 1
      %v1701 = vsel %vm1686, %v1698, %v1700
      %v1702 = vrot.slane %v1598, 1
      %v1703 = vrot.slane %v1599, 1
      %v1704 = vsel %vm1686, %v1702, %v1703
      %v1705 = vrot.slane %v1600, 1
      %v1706 = vsel %vm1686, %v1703, %v1705
      %v1707 = vrot.slane %v1601, 1
      %v1708 = vrot.slane %v1602, 1
      %v1709 = vsel %vm1686, %v1707, %v1708
      %v1710 = vrot.slane %v1603, 1
      %v1711 = vsel %vm1686, %v1708, %v1710
      %v1712 = vrot.slane %v1604, 1
      %v1713 = vrot.slane %v1605, 1
      %v1714 = vsel %vm1686, %v1712, %v1713
      %v1715 = vrot.slane %v1606, 1
      %v1716 = vsel %vm1686, %v1713, %v1715
      %v1717 = vrot.slane %v1607, 1
      %v1718 = vrot.slane %v1608, 1
      %v1719 = vsel %vm1686, %v1717, %v1718
      %v1720 = vrot.slane %v1609, 1
      %v1721 = vsel %vm1686, %v1718, %v1720
      %v1722 = vrot.slane %v1610, 1
      %v1723 = vrot.slane %v1611, 1
      %v1724 = vsel %vm1686, %v1722, %v1723
      %v1725 = vrot.slane %v1612, 1
      %v1726 = vsel %vm1686, %v1723, %v1725
      %v1727 = vrot.slane %v1613, 1
      %v1728 = vrot.slane %v1614, 1
      %v1729 = vsel %vm1686, %v1727, %v1728
      %v1730 = vrot.slane %v1615, 1
      %v1731 = vsel %vm1686, %v1728, %v1730
      %v1732 = vrot.slane %v1616, 1
      %v1733 = vrot.slane %v1617, 1
      %v1734 = vsel %vm1686, %v1732, %v1733
      %v1735 = vrot.slane %v1618, 1
      %v1736 = vsel %vm1686, %v1733, %v1735
      %v1737 = vrot.slane %v1619, 1
      %v1738 = vrot.slane %v1620, 1
      %v1739 = vsel %vm1686, %v1737, %v1738
      %v1740 = vrot.slane %v1621, 1
      %v1741 = vsel %vm1686, %v1738, %v1740
      %v1742 = vrot.slane %v1622, 1
      %v1743 = vrot.slane %v1623, 1
      %v1744 = vsel %vm1686, %v1742, %v1743
      %v1745 = vrot.slane %v1624, 1
      %v1746 = vsel %vm1686, %v1743, %v1745
      %v1747 = vrot.slane %v1625, 1
      %v1748 = vrot.slane %v1626, 1
      %v1749 = vsel %vm1686, %v1747, %v1748
      %v1750 = vrot.slane %v1627, 1
      %v1751 = vsel %vm1686, %v1748, %v1750
      %v1752 = vrot.slane %v1628, 1
      %v1753 = vrot.slane %v1629, 1
      %v1754 = vsel %vm1686, %v1752, %v1753
      %v1755 = vrot.slane %v1630, 1
      %v1756 = vsel %vm1686, %v1753, %v1755
      %v1757 = vrot.slane %v1631, 1
      %v1758 = vrot.slane %v1632, 1
      %v1759 = vsel %vm1686, %v1757, %v1758
      %v1760 = vrot.slane %v1633, 1
      %v1761 = vsel %vm1686, %v1758, %v1760
      %v1762 = vrot.slane %v1634, 1
      %v1763 = vrot.slane %v1635, 1
      %v1764 = vsel %vm1686, %v1762, %v1763
      %v1765 = vrot.slane %v1636, 1
      %v1766 = vsel %vm1686, %v1763, %v1765
      %s1767 = scalar_lea.vmem %s2, 8
      %v1768 = vld [vmem:[%s1767] sm:$0x3f]
      %vm1769 = vcmask 48128
      %v1770 = vsel %vm1769, %v1689, 0
      %v1772 = vsel %vm1769, %v1691, 0
      %v1774 = vsel %vm1769, %v1694, 0
      %v1776 = vsel %vm1769, %v1696, 0
      %v1778 = vsel %vm1769, %v1699, 0
      %v1780 = vsel %vm1769, %v1701, 0
      %v1782 = vsel %vm1769, %v1704, 0
      %v1784 = vsel %vm1769, %v1706, 0
      %v1786 = vsel %vm1769, %v1709, 0
      %v1788 = vsel %vm1769, %v1711, 0
      %v1790 = vsel %vm1769, %v1714, 0
      %v1792 = vsel %vm1769, %v1716, 0
      %v1794 = vsel %vm1769, %v1719, 0
      %v1796 = vsel %vm1769, %v1721, 0
      %v1798 = vsel %vm1769, %v1724, 0
      %v1800 = vsel %vm1769, %v1726, 0
      %v1802 = vsel %vm1769, %v1729, 0
      %v1804 = vsel %vm1769, %v1731, 0
      %v1806 = vsel %vm1769, %v1734, 0
      %v1808 = vsel %vm1769, %v1736, 0
      %v1810 = vsel %vm1769, %v1739, 0
      %v1812 = vsel %vm1769, %v1741, 0
      %v1814 = vsel %vm1769, %v1744, 0
      %v1816 = vsel %vm1769, %v1746, 0
      %v1818 = vsel %vm1769, %v1749, 0
      %v1820 = vsel %vm1769, %v1751, 0
      %v1822 = vsel %vm1769, %v1754, 0
      %v1824 = vsel %vm1769, %v1756, 0
      %v1826 = vsel %vm1769, %v1759, 0
      %v1828 = vsel %vm1769, %v1761, 0
      %v1830 = vsel %vm1769, %v1764, 0
      %v1832 = vsel %vm1769, %v1766, 0
      %vm1834 = vcmask 1045504
      %v1836 = vsel %vm1834, %v1768, 0
      %1838 = vmatprep.subr.mxu0 0.0
      %1839 = vmatpush1.msra.mxu0 0.0
      %1840 = vmatprep.subr.mxu0 0.0
      %1841 = vmatpush1.msra.mxu0 0.0
      %1842 = vmatprep.subr.mxu0 0.0
      %1843 = vmatpush1.msra.mxu0 0.0
      %1844 = vmatprep.subr.mxu0 0.0
      %1845 = vmatpush1.msra.mxu0 0.0
      %1846 = vmatprep.subr.mxu0 0.0
      %1847 = vmatpush1.msra.mxu0 0.0
      %1848 = vmatprep.subr.mxu0 0.0
      %1849 = vmatpush1.msra.mxu0 0.0
      %1850 = vmatprep.subr.mxu0 0.0
      %1851 = vmatpush1.msra.mxu0 0.0
      %1852 = vmatprep.subr.mxu0 0.0
      %1853 = vmatpush1.msra.mxu0 0.0
      %1854 = vmatprep.subr.mxu0 0.0
      %1855 = vmatpush1.msra.mxu0 0.0
      %1856 = vmatprep.subr.mxu0 0.0
      %1857 = vmatpush1.msra.mxu0 0.0
      %1858 = vmatprep.subr.mxu0 0.0
      %1859 = vmatpush1.msra.mxu0 0.0
      %1860 = vmatprep.subr.mxu0 0.0
      %1861 = vmatpush1.msra.mxu0 0.0
      %1862 = vmatprep.subr.mxu0 0.0
      %1863 = vmatpush1.msra.mxu0 0.0
      %1864 = vmatprep.subr.mxu0 0.0
      %1865 = vmatpush1.msra.mxu0 0.0
      %1866 = vmatprep.subr.mxu0 0.0
      %1867 = vmatpush1.msra.mxu0 0.0
      %1868 = vmatprep.subr.mxu0 0.0
      %1869 = vmatpush1.msra.mxu0 %v1836
      %1870 = vmatprep.subr.mxu0 0.0
      %1871 = vmatpush2.msra.mxu0 0.0
      %1872 = vmatprep.subr.mxu0 0.0
      %1873 = vmatpush2.msra.mxu0 0.0
      %1874 = vmatprep.subr.mxu0 0.0
      %1875 = vmatpush2.msra.mxu0 0.0
      %1876 = vmatprep.subr.mxu0 0.0
      %1877 = vmatpush2.msra.mxu0 0.0
      %1878 = vmatprep.subr.mxu0 0.0
      %1879 = vmatpush2.msra.mxu0 0.0
      %1880 = vmatprep.subr.mxu0 0.0
      %1881 = vmatpush2.msra.mxu0 0.0
      %1882 = vmatprep.subr.mxu0 0.0
      %1883 = vmatpush2.msra.mxu0 0.0
      %1884 = vmatprep.subr.mxu0 0.0
      %1885 = vmatpush2.msra.mxu0 0.0
      %1886 = vmatprep.subr.mxu0 0.0
      %1887 = vmatpush2.msra.mxu0 0.0
      %1888 = vmatprep.subr.mxu0 0.0
      %1889 = vmatpush2.msra.mxu0 0.0
      %1890 = vmatprep.subr.mxu0 0.0
      %1891 = vmatpush2.msra.mxu0 0.0
      %1892 = vmatprep.subr.mxu0 0.0
      %1893 = vmatpush2.msra.mxu0 0.0
      %1894 = vmatprep.subr.mxu0 0.0
      %1895 = vmatpush2.msra.mxu0 0.0
      %1896 = vmatprep.subr.mxu0 0.0
      %1897 = vmatpush2.msra.mxu0 0.0
      %1898 = vmatprep.subr.mxu0 0.0
      %1899 = vmatpush2.msra.mxu0 0.0
      %1900 = vmatprep.subr.mxu0 0.0
      %1901 = vmatpush2.msra.mxu0 0.0
      %1902 = vmatprep.mubr.f32.mxu0 0.0
      %1903 = vmatmul.mubr.f32.gmra.mxu0 %v1770
      %v1904 = vpop.f32.mrf.mxu0
      %v1905 = vadd.f32 0.0, %v1904
      %v1906 = vpop.f32.mrf.mxu0
      %1907 = vmatprep.mubr.f32.mxu0 0.0
      %1908 = vmatmul.mubr.f32.gmra.mxu0 %v1772
      %v1909 = vpop.f32.mrf.mxu0
      %v1910 = vadd.f32 0.0, %v1909
      %v1911 = vpop.f32.mrf.mxu0
      %1912 = vmatprep.mubr.f32.mxu0 0.0
      %1913 = vmatmul.mubr.f32.gmra.mxu0 %v1774
      %v1914 = vpop.f32.mrf.mxu0
      %v1915 = vadd.f32 0.0, %v1914
      %v1916 = vpop.f32.mrf.mxu0
      %1917 = vmatprep.mubr.f32.mxu0 0.0
      %1918 = vmatmul.mubr.f32.gmra.mxu0 %v1776
      %v1919 = vpop.f32.mrf.mxu0
      %v1920 = vadd.f32 0.0, %v1919
      %v1921 = vpop.f32.mrf.mxu0
      %1922 = vmatprep.mubr.f32.mxu0 0.0
      %1923 = vmatmul.mubr.f32.gmra.mxu0 %v1778
      %v1924 = vpop.f32.mrf.mxu0
      %v1925 = vadd.f32 0.0, %v1924
      %v1926 = vpop.f32.mrf.mxu0
      %1927 = vmatprep.mubr.f32.mxu0 0.0
      %1928 = vmatmul.mubr.f32.gmra.mxu0 %v1780
      %v1929 = vpop.f32.mrf.mxu0
      %v1930 = vadd.f32 0.0, %v1929
      %v1931 = vpop.f32.mrf.mxu0
      %1932 = vmatprep.mubr.f32.mxu0 0.0
      %1933 = vmatmul.mubr.f32.gmra.mxu0 %v1782
      %v1934 = vpop.f32.mrf.mxu0
      %v1935 = vadd.f32 0.0, %v1934
      %v1936 = vpop.f32.mrf.mxu0
      %1937 = vmatprep.mubr.f32.mxu0 0.0
      %1938 = vmatmul.mubr.f32.gmra.mxu0 %v1784
      %v1939 = vpop.f32.mrf.mxu0
      %v1940 = vadd.f32 0.0, %v1939
      %v1941 = vpop.f32.mrf.mxu0
      %1942 = vmatprep.mubr.f32.mxu0 0.0
      %1943 = vmatmul.mubr.f32.gmra.mxu0 %v1786
      %v1944 = vpop.f32.mrf.mxu0
      %v1945 = vadd.f32 0.0, %v1944
      %v1946 = vpop.f32.mrf.mxu0
      %1947 = vmatprep.mubr.f32.mxu0 0.0
      %1948 = vmatmul.mubr.f32.gmra.mxu0 %v1788
      %v1949 = vpop.f32.mrf.mxu0
      %v1950 = vadd.f32 0.0, %v1949
      %v1951 = vpop.f32.mrf.mxu0
      %1952 = vmatprep.mubr.f32.mxu0 0.0
      %1953 = vmatmul.mubr.f32.gmra.mxu0 %v1790
      %v1954 = vpop.f32.mrf.mxu0
      %v1955 = vadd.f32 0.0, %v1954
      %v1956 = vpop.f32.mrf.mxu0
      %1957 = vmatprep.mubr.f32.mxu0 0.0
      %1958 = vmatmul.mubr.f32.gmra.mxu0 %v1792
      %v1959 = vpop.f32.mrf.mxu0
      %v1960 = vadd.f32 0.0, %v1959
      %v1961 = vpop.f32.mrf.mxu0
      %1962 = vmatprep.mubr.f32.mxu0 0.0
      %1963 = vmatmul.mubr.f32.gmra.mxu0 %v1794
      %v1964 = vpop.f32.mrf.mxu0
      %v1965 = vadd.f32 0.0, %v1964
      %v1966 = vpop.f32.mrf.mxu0
      %1967 = vmatprep.mubr.f32.mxu0 0.0
      %1968 = vmatmul.mubr.f32.gmra.mxu0 %v1796
      %v1969 = vpop.f32.mrf.mxu0
      %v1970 = vadd.f32 0.0, %v1969
      %v1971 = vpop.f32.mrf.mxu0
      %1972 = vmatprep.mubr.f32.mxu0 0.0
      %1973 = vmatmul.mubr.f32.gmra.mxu0 %v1798
      %v1974 = vpop.f32.mrf.mxu0
      %v1975 = vadd.f32 0.0, %v1974
      %v1976 = vpop.f32.mrf.mxu0
      %1977 = vmatprep.mubr.f32.mxu0 0.0
      %1978 = vmatmul.mubr.f32.gmra.mxu0 %v1800
      %v1979 = vpop.f32.mrf.mxu0
      %v1980 = vadd.f32 0.0, %v1979
      %v1981 = vpop.f32.mrf.mxu0
      %1982 = vmatprep.mubr.f32.mxu0 0.0
      %1983 = vmatmul.mubr.f32.gmra.mxu0 %v1802
      %v1984 = vpop.f32.mrf.mxu0
      %v1985 = vadd.f32 0.0, %v1984
      %v1986 = vpop.f32.mrf.mxu0
      %1987 = vmatprep.mubr.f32.mxu0 0.0
      %1988 = vmatmul.mubr.f32.gmra.mxu0 %v1804
      %v1989 = vpop.f32.mrf.mxu0
      %v1990 = vadd.f32 0.0, %v1989
      %v1991 = vpop.f32.mrf.mxu0
      %1992 = vmatprep.mubr.f32.mxu0 0.0
      %1993 = vmatmul.mubr.f32.gmra.mxu0 %v1806
      %v1994 = vpop.f32.mrf.mxu0
      %v1995 = vadd.f32 0.0, %v1994
      %v1996 = vpop.f32.mrf.mxu0
      %1997 = vmatprep.mubr.f32.mxu0 0.0
      %1998 = vmatmul.mubr.f32.gmra.mxu0 %v1808
      %v1999 = vpop.f32.mrf.mxu0
      %v2000 = vadd.f32 0.0, %v1999
      %v2001 = vpop.f32.mrf.mxu0
      %2002 = vmatprep.mubr.f32.mxu0 0.0
      %2003 = vmatmul.mubr.f32.gmra.mxu0 %v1810
      %v2004 = vpop.f32.mrf.mxu0
      %v2005 = vadd.f32 0.0, %v2004
      %v2006 = vpop.f32.mrf.mxu0
      %2007 = vmatprep.mubr.f32.mxu0 0.0
      %2008 = vmatmul.mubr.f32.gmra.mxu0 %v1812
      %v2009 = vpop.f32.mrf.mxu0
      %v2010 = vadd.f32 0.0, %v2009
      %v2011 = vpop.f32.mrf.mxu0
      %2012 = vmatprep.mubr.f32.mxu0 0.0
      %2013 = vmatmul.mubr.f32.gmra.mxu0 %v1814
      %v2014 = vpop.f32.mrf.mxu0
      %v2015 = vadd.f32 0.0, %v2014
      %v2016 = vpop.f32.mrf.mxu0
      %2017 = vmatprep.mubr.f32.mxu0 0.0
      %2018 = vmatmul.mubr.f32.gmra.mxu0 %v1816
      %v2019 = vpop.f32.mrf.mxu0
      %v2020 = vadd.f32 0.0, %v2019
      %v2021 = vpop.f32.mrf.mxu0
      %2022 = vmatprep.mubr.f32.mxu0 0.0
      %2023 = vmatmul.mubr.f32.gmra.mxu0 %v1818
      %v2024 = vpop.f32.mrf.mxu0
      %v2025 = vadd.f32 0.0, %v2024
      %v2026 = vpop.f32.mrf.mxu0
      %2027 = vmatprep.mubr.f32.mxu0 0.0
      %2028 = vmatmul.mubr.f32.gmra.mxu0 %v1820
      %v2029 = vpop.f32.mrf.mxu0
      %v2030 = vadd.f32 0.0, %v2029
      %v2031 = vpop.f32.mrf.mxu0
      %2032 = vmatprep.mubr.f32.mxu0 0.0
      %2033 = vmatmul.mubr.f32.gmra.mxu0 %v1822
      %v2034 = vpop.f32.mrf.mxu0
      %v2035 = vadd.f32 0.0, %v2034
      %v2036 = vpop.f32.mrf.mxu0
      %2037 = vmatprep.mubr.f32.mxu0 0.0
      %2038 = vmatmul.mubr.f32.gmra.mxu0 %v1824
      %v2039 = vpop.f32.mrf.mxu0
      %v2040 = vadd.f32 0.0, %v2039
      %v2041 = vpop.f32.mrf.mxu0
      %2042 = vmatprep.mubr.f32.mxu0 0.0
      %2043 = vmatmul.mubr.f32.gmra.mxu0 %v1826
      %v2044 = vpop.f32.mrf.mxu0
      %v2045 = vadd.f32 0.0, %v2044
      %v2046 = vpop.f32.mrf.mxu0
      %2047 = vmatprep.mubr.f32.mxu0 0.0
      %2048 = vmatmul.mubr.f32.gmra.mxu0 %v1828
      %v2049 = vpop.f32.mrf.mxu0
      %v2050 = vadd.f32 0.0, %v2049
      %v2051 = vpop.f32.mrf.mxu0
      %2052 = vmatprep.mubr.f32.mxu0 0.0
      %2053 = vmatmul.mubr.f32.gmra.mxu0 %v1830
      %v2054 = vpop.f32.mrf.mxu0
      %v2055 = vadd.f32 0.0, %v2054
      %v2056 = vpop.f32.mrf.mxu0
      %2057 = vmatprep.mubr.f32.mxu0 0.0
      %2058 = vmatmul.mubr.f32.gmra.mxu0 %v1832
      %v2059 = vpop.f32.mrf.mxu0
      %v2060 = vadd.f32 0.0, %v2059
      %v2061 = vpop.f32.mrf.mxu0
      %2062 = vdwg.mxu0
      %v2063 = vsel %vm1769, %v1589, 0
      %v2065 = vsel %vm1769, %v1590, 0
      %v2067 = vsel %vm1769, %v1592, 0
      %v2069 = vsel %vm1769, %v1593, 0
      %v2071 = vsel %vm1769, %v1595, 0
      %v2073 = vsel %vm1769, %v1596, 0
      %v2075 = vsel %vm1769, %v1598, 0
      %v2077 = vsel %vm1769, %v1599, 0
      %v2079 = vsel %vm1769, %v1601, 0
      %v2081 = vsel %vm1769, %v1602, 0
      %v2083 = vsel %vm1769, %v1604, 0
      %v2085 = vsel %vm1769, %v1605, 0
      %v2087 = vsel %vm1769, %v1607, 0
      %v2089 = vsel %vm1769, %v1608, 0
      %v2091 = vsel %vm1769, %v1610, 0
      %v2093 = vsel %vm1769, %v1611, 0
      %v2095 = vsel %vm1769, %v1613, 0
      %v2097 = vsel %vm1769, %v1614, 0
      %v2099 = vsel %vm1769, %v1616, 0
      %v2101 = vsel %vm1769, %v1617, 0
      %v2103 = vsel %vm1769, %v1619, 0
      %v2105 = vsel %vm1769, %v1620, 0
      %v2107 = vsel %vm1769, %v1622, 0
      %v2109 = vsel %vm1769, %v1623, 0
      %v2111 = vsel %vm1769, %v1625, 0
      %v2113 = vsel %vm1769, %v1626, 0
      %v2115 = vsel %vm1769, %v1628, 0
      %v2117 = vsel %vm1769, %v1629, 0
      %v2119 = vsel %vm1769, %v1631, 0
      %v2121 = vsel %vm1769, %v1632, 0
      %v2123 = vsel %vm1769, %v1634, 0
      %v2125 = vsel %vm1769, %v1635, 0
      %v2128 = vsel %vm1834, %v1637, 0
      %2130 = vmatprep.subr.mxu0 0.0
      %2131 = vmatpush1.msra.mxu0 0.0
      %2132 = vmatprep.subr.mxu0 0.0
      %2133 = vmatpush1.msra.mxu0 0.0
      %2134 = vmatprep.subr.mxu0 0.0
      %2135 = vmatpush1.msra.mxu0 0.0
      %2136 = vmatprep.subr.mxu0 0.0
      %2137 = vmatpush1.msra.mxu0 0.0
      %2138 = vmatprep.subr.mxu0 0.0
      %2139 = vmatpush1.msra.mxu0 0.0
      %2140 = vmatprep.subr.mxu0 0.0
      %2141 = vmatpush1.msra.mxu0 0.0
      %2142 = vmatprep.subr.mxu0 0.0
      %2143 = vmatpush1.msra.mxu0 0.0
      %2144 = vmatprep.subr.mxu0 0.0
      %2145 = vmatpush1.msra.mxu0 0.0
      %2146 = vmatprep.subr.mxu0 0.0
      %2147 = vmatpush1.msra.mxu0 0.0
      %2148 = vmatprep.subr.mxu0 0.0
      %2149 = vmatpush1.msra.mxu0 0.0
      %2150 = vmatprep.subr.mxu0 0.0
      %2151 = vmatpush1.msra.mxu0 0.0
      %2152 = vmatprep.subr.mxu0 0.0
      %2153 = vmatpush1.msra.mxu0 0.0
      %2154 = vmatprep.subr.mxu0 0.0
      %2155 = vmatpush1.msra.mxu0 0.0
      %2156 = vmatprep.subr.mxu0 0.0
      %2157 = vmatpush1.msra.mxu0 0.0
      %2158 = vmatprep.subr.mxu0 0.0
      %2159 = vmatpush1.msra.mxu0 0.0
      %2160 = vmatprep.subr.mxu0 0.0
      %2161 = vmatpush1.msra.mxu0 %v2128
      %2162 = vmatprep.subr.mxu0 0.0
      %2163 = vmatpush2.msra.mxu0 0.0
      %2164 = vmatprep.subr.mxu0 0.0
      %2165 = vmatpush2.msra.mxu0 0.0
      %2166 = vmatprep.subr.mxu0 0.0
      %2167 = vmatpush2.msra.mxu0 0.0
      %2168 = vmatprep.subr.mxu0 0.0
      %2169 = vmatpush2.msra.mxu0 0.0
      %2170 = vmatprep.subr.mxu0 0.0
      %2171 = vmatpush2.msra.mxu0 0.0
      %2172 = vmatprep.subr.mxu0 0.0
      %2173 = vmatpush2.msra.mxu0 0.0
      %2174 = vmatprep.subr.mxu0 0.0
      %2175 = vmatpush2.msra.mxu0 0.0
      %2176 = vmatprep.subr.mxu0 0.0
      %2177 = vmatpush2.msra.mxu0 0.0
      %2178 = vmatprep.subr.mxu0 0.0
      %2179 = vmatpush2.msra.mxu0 0.0
      %2180 = vmatprep.subr.mxu0 0.0
      %2181 = vmatpush2.msra.mxu0 0.0
      %2182 = vmatprep.subr.mxu0 0.0
      %2183 = vmatpush2.msra.mxu0 0.0
      %2184 = vmatprep.subr.mxu0 0.0
      %2185 = vmatpush2.msra.mxu0 0.0
      %2186 = vmatprep.subr.mxu0 0.0
      %2187 = vmatpush2.msra.mxu0 0.0
      %2188 = vmatprep.subr.mxu0 0.0
      %2189 = vmatpush2.msra.mxu0 0.0
      %2190 = vmatprep.subr.mxu0 0.0
      %2191 = vmatpush2.msra.mxu0 0.0
      %2192 = vmatprep.subr.mxu0 0.0
      %2193 = vmatpush2.msra.mxu0 0.0
      %2194 = vmatprep.mubr.f32.mxu0 0.0
      %2195 = vmatmul.mubr.f32.gmra.mxu0 %v2063
      %v2196 = vpop.f32.mrf.mxu0
      %v2197 = vadd.f32 %v1905, %v2196
      %v2198 = vpop.f32.mrf.mxu0
      %2199 = vmatprep.mubr.f32.mxu0 0.0
      %2200 = vmatmul.mubr.f32.gmra.mxu0 %v2065
      %v2201 = vpop.f32.mrf.mxu0
      %v2202 = vadd.f32 %v1910, %v2201
      %v2203 = vpop.f32.mrf.mxu0
      %2204 = vmatprep.mubr.f32.mxu0 0.0
      %2205 = vmatmul.mubr.f32.gmra.mxu0 %v2067
      %v2206 = vpop.f32.mrf.mxu0
      %v2207 = vadd.f32 %v1915, %v2206
      %v2208 = vpop.f32.mrf.mxu0
      %2209 = vmatprep.mubr.f32.mxu0 0.0
      %2210 = vmatmul.mubr.f32.gmra.mxu0 %v2069
      %v2211 = vpop.f32.mrf.mxu0
      %v2212 = vadd.f32 %v1920, %v2211
      %v2213 = vpop.f32.mrf.mxu0
      %2214 = vmatprep.mubr.f32.mxu0 0.0
      %2215 = vmatmul.mubr.f32.gmra.mxu0 %v2071
      %v2216 = vpop.f32.mrf.mxu0
      %v2217 = vadd.f32 %v1925, %v2216
      %v2218 = vpop.f32.mrf.mxu0
      %2219 = vmatprep.mubr.f32.mxu0 0.0
      %2220 = vmatmul.mubr.f32.gmra.mxu0 %v2073
      %v2221 = vpop.f32.mrf.mxu0
      %v2222 = vadd.f32 %v1930, %v2221
      %v2223 = vpop.f32.mrf.mxu0
      %2224 = vmatprep.mubr.f32.mxu0 0.0
      %2225 = vmatmul.mubr.f32.gmra.mxu0 %v2075
      %v2226 = vpop.f32.mrf.mxu0
      %v2227 = vadd.f32 %v1935, %v2226
      %v2228 = vpop.f32.mrf.mxu0
      %2229 = vmatprep.mubr.f32.mxu0 0.0
      %2230 = vmatmul.mubr.f32.gmra.mxu0 %v2077
      %v2231 = vpop.f32.mrf.mxu0
      %v2232 = vadd.f32 %v1940, %v2231
      %v2233 = vpop.f32.mrf.mxu0
      %2234 = vmatprep.mubr.f32.mxu0 0.0
      %2235 = vmatmul.mubr.f32.gmra.mxu0 %v2079
      %v2236 = vpop.f32.mrf.mxu0
      %v2237 = vadd.f32 %v1945, %v2236
      %v2238 = vpop.f32.mrf.mxu0
      %2239 = vmatprep.mubr.f32.mxu0 0.0
      %2240 = vmatmul.mubr.f32.gmra.mxu0 %v2081
      %v2241 = vpop.f32.mrf.mxu0
      %v2242 = vadd.f32 %v1950, %v2241
      %v2243 = vpop.f32.mrf.mxu0
      %2244 = vmatprep.mubr.f32.mxu0 0.0
      %2245 = vmatmul.mubr.f32.gmra.mxu0 %v2083
      %v2246 = vpop.f32.mrf.mxu0
      %v2247 = vadd.f32 %v1955, %v2246
      %v2248 = vpop.f32.mrf.mxu0
      %2249 = vmatprep.mubr.f32.mxu0 0.0
      %2250 = vmatmul.mubr.f32.gmra.mxu0 %v2085
      %v2251 = vpop.f32.mrf.mxu0
      %v2252 = vadd.f32 %v1960, %v2251
      %v2253 = vpop.f32.mrf.mxu0
      %2254 = vmatprep.mubr.f32.mxu0 0.0
      %2255 = vmatmul.mubr.f32.gmra.mxu0 %v2087
      %v2256 = vpop.f32.mrf.mxu0
      %v2257 = vadd.f32 %v1965, %v2256
      %v2258 = vpop.f32.mrf.mxu0
      %2259 = vmatprep.mubr.f32.mxu0 0.0
      %2260 = vmatmul.mubr.f32.gmra.mxu0 %v2089
      %v2261 = vpop.f32.mrf.mxu0
      %v2262 = vadd.f32 %v1970, %v2261
      %v2263 = vpop.f32.mrf.mxu0
      %2264 = vmatprep.mubr.f32.mxu0 0.0
      %2265 = vmatmul.mubr.f32.gmra.mxu0 %v2091
      %v2266 = vpop.f32.mrf.mxu0
      %v2267 = vadd.f32 %v1975, %v2266
      %v2268 = vpop.f32.mrf.mxu0
      %2269 = vmatprep.mubr.f32.mxu0 0.0
      %2270 = vmatmul.mubr.f32.gmra.mxu0 %v2093
      %v2271 = vpop.f32.mrf.mxu0
      %v2272 = vadd.f32 %v1980, %v2271
      %v2273 = vpop.f32.mrf.mxu0
      %2274 = vmatprep.mubr.f32.mxu0 0.0
      %2275 = vmatmul.mubr.f32.gmra.mxu0 %v2095
      %v2276 = vpop.f32.mrf.mxu0
      %v2277 = vadd.f32 %v1985, %v2276
      %v2278 = vpop.f32.mrf.mxu0
      %2279 = vmatprep.mubr.f32.mxu0 0.0
      %2280 = vmatmul.mubr.f32.gmra.mxu0 %v2097
      %v2281 = vpop.f32.mrf.mxu0
      %v2282 = vadd.f32 %v1990, %v2281
      %v2283 = vpop.f32.mrf.mxu0
      %2284 = vmatprep.mubr.f32.mxu0 0.0
      %2285 = vmatmul.mubr.f32.gmra.mxu0 %v2099
      %v2286 = vpop.f32.mrf.mxu0
      %v2287 = vadd.f32 %v1995, %v2286
      %v2288 = vpop.f32.mrf.mxu0
      %2289 = vmatprep.mubr.f32.mxu0 0.0
      %2290 = vmatmul.mubr.f32.gmra.mxu0 %v2101
      %v2291 = vpop.f32.mrf.mxu0
      %v2292 = vadd.f32 %v2000, %v2291
      %v2293 = vpop.f32.mrf.mxu0
      %2294 = vmatprep.mubr.f32.mxu0 0.0
      %2295 = vmatmul.mubr.f32.gmra.mxu0 %v2103
      %v2296 = vpop.f32.mrf.mxu0
      %v2297 = vadd.f32 %v2005, %v2296
      %v2298 = vpop.f32.mrf.mxu0
      %2299 = vmatprep.mubr.f32.mxu0 0.0
      %2300 = vmatmul.mubr.f32.gmra.mxu0 %v2105
      %v2301 = vpop.f32.mrf.mxu0
      %v2302 = vadd.f32 %v2010, %v2301
      %v2303 = vpop.f32.mrf.mxu0
      %2304 = vmatprep.mubr.f32.mxu0 0.0
      %2305 = vmatmul.mubr.f32.gmra.mxu0 %v2107
      %v2306 = vpop.f32.mrf.mxu0
      %v2307 = vadd.f32 %v2015, %v2306
      %v2308 = vpop.f32.mrf.mxu0
      %2309 = vmatprep.mubr.f32.mxu0 0.0
      %2310 = vmatmul.mubr.f32.gmra.mxu0 %v2109
      %v2311 = vpop.f32.mrf.mxu0
      %v2312 = vadd.f32 %v2020, %v2311
      %v2313 = vpop.f32.mrf.mxu0
      %2314 = vmatprep.mubr.f32.mxu0 0.0
      %2315 = vmatmul.mubr.f32.gmra.mxu0 %v2111
      %v2316 = vpop.f32.mrf.mxu0
      %v2317 = vadd.f32 %v2025, %v2316
      %v2318 = vpop.f32.mrf.mxu0
      %2319 = vmatprep.mubr.f32.mxu0 0.0
      %2320 = vmatmul.mubr.f32.gmra.mxu0 %v2113
      %v2321 = vpop.f32.mrf.mxu0
      %v2322 = vadd.f32 %v2030, %v2321
      %v2323 = vpop.f32.mrf.mxu0
      %2324 = vmatprep.mubr.f32.mxu0 0.0
      %2325 = vmatmul.mubr.f32.gmra.mxu0 %v2115
      %v2326 = vpop.f32.mrf.mxu0
      %v2327 = vadd.f32 %v2035, %v2326
      %v2328 = vpop.f32.mrf.mxu0
      %2329 = vmatprep.mubr.f32.mxu0 0.0
      %2330 = vmatmul.mubr.f32.gmra.mxu0 %v2117
      %v2331 = vpop.f32.mrf.mxu0
      %v2332 = vadd.f32 %v2040, %v2331
      %v2333 = vpop.f32.mrf.mxu0
      %2334 = vmatprep.mubr.f32.mxu0 0.0
      %2335 = vmatmul.mubr.f32.gmra.mxu0 %v2119
      %v2336 = vpop.f32.mrf.mxu0
      %v2337 = vadd.f32 %v2045, %v2336
      %v2338 = vpop.f32.mrf.mxu0
      %2339 = vmatprep.mubr.f32.mxu0 0.0
      %2340 = vmatmul.mubr.f32.gmra.mxu0 %v2121
      %v2341 = vpop.f32.mrf.mxu0
      %v2342 = vadd.f32 %v2050, %v2341
      %v2343 = vpop.f32.mrf.mxu0
      %2344 = vmatprep.mubr.f32.mxu0 0.0
      %2345 = vmatmul.mubr.f32.gmra.mxu0 %v2123
      %v2346 = vpop.f32.mrf.mxu0
      %v2347 = vadd.f32 %v2055, %v2346
      %v2348 = vpop.f32.mrf.mxu0
      %2349 = vmatprep.mubr.f32.mxu0 0.0
      %2350 = vmatmul.mubr.f32.gmra.mxu0 %v2125
      %v2351 = vpop.f32.mrf.mxu0
      %v2352 = vadd.f32 %v2060, %v2351
      %v2353 = vpop.f32.mrf.mxu0
      %2354 = vdwg.mxu0
      %v2355 = vrot.slane %v1589, 2
      %v2356 = vrot.slane %v1590, 2
      %v2357 = vsel %vm1834, %v2355, %v2356
      %v2358 = vrot.slane %v1591, 2
      %v2359 = vsel %vm1834, %v2356, %v2358
      %v2360 = vrot.slane %v1592, 2
      %v2361 = vrot.slane %v1593, 2
      %v2362 = vsel %vm1834, %v2360, %v2361
      %v2363 = vrot.slane %v1594, 2
      %v2364 = vsel %vm1834, %v2361, %v2363
      %v2365 = vrot.slane %v1595, 2
      %v2366 = vrot.slane %v1596, 2
      %v2367 = vsel %vm1834, %v2365, %v2366
      %v2368 = vrot.slane %v1597, 2
      %v2369 = vsel %vm1834, %v2366, %v2368
      %v2370 = vrot.slane %v1598, 2
      %v2371 = vrot.slane %v1599, 2
      %v2372 = vsel %vm1834, %v2370, %v2371
      %v2373 = vrot.slane %v1600, 2
      %v2374 = vsel %vm1834, %v2371, %v2373
      %v2375 = vrot.slane %v1601, 2
      %v2376 = vrot.slane %v1602, 2
      %v2377 = vsel %vm1834, %v2375, %v2376
      %v2378 = vrot.slane %v1603, 2
      %v2379 = vsel %vm1834, %v2376, %v2378
      %v2380 = vrot.slane %v1604, 2
      %v2381 = vrot.slane %v1605, 2
      %v2382 = vsel %vm1834, %v2380, %v2381
      %v2383 = vrot.slane %v1606, 2
      %v2384 = vsel %vm1834, %v2381, %v2383
      %v2385 = vrot.slane %v1607, 2
      %v2386 = vrot.slane %v1608, 2
      %v2387 = vsel %vm1834, %v2385, %v2386
      %v2388 = vrot.slane %v1609, 2
      %v2389 = vsel %vm1834, %v2386, %v2388
      %v2390 = vrot.slane %v1610, 2
      %v2391 = vrot.slane %v1611, 2
      %v2392 = vsel %vm1834, %v2390, %v2391
      %v2393 = vrot.slane %v1612, 2
      %v2394 = vsel %vm1834, %v2391, %v2393
      %v2395 = vrot.slane %v1613, 2
      %v2396 = vrot.slane %v1614, 2
      %v2397 = vsel %vm1834, %v2395, %v2396
      %v2398 = vrot.slane %v1615, 2
      %v2399 = vsel %vm1834, %v2396, %v2398
      %v2400 = vrot.slane %v1616, 2
      %v2401 = vrot.slane %v1617, 2
      %v2402 = vsel %vm1834, %v2400, %v2401
      %v2403 = vrot.slane %v1618, 2
      %v2404 = vsel %vm1834, %v2401, %v2403
      %v2405 = vrot.slane %v1619, 2
      %v2406 = vrot.slane %v1620, 2
      %v2407 = vsel %vm1834, %v2405, %v2406
      %v2408 = vrot.slane %v1621, 2
      %v2409 = vsel %vm1834, %v2406, %v2408
      %v2410 = vrot.slane %v1622, 2
      %v2411 = vrot.slane %v1623, 2
      %v2412 = vsel %vm1834, %v2410, %v2411
      %v2413 = vrot.slane %v1624, 2
      %v2414 = vsel %vm1834, %v2411, %v2413
      %v2415 = vrot.slane %v1625, 2
      %v2416 = vrot.slane %v1626, 2
      %v2417 = vsel %vm1834, %v2415, %v2416
      %v2418 = vrot.slane %v1627, 2
      %v2419 = vsel %vm1834, %v2416, %v2418
      %v2420 = vrot.slane %v1628, 2
      %v2421 = vrot.slane %v1629, 2
      %v2422 = vsel %vm1834, %v2420, %v2421
      %v2423 = vrot.slane %v1630, 2
      %v2424 = vsel %vm1834, %v2421, %v2423
      %v2425 = vrot.slane %v1631, 2
      %v2426 = vrot.slane %v1632, 2
      %v2427 = vsel %vm1834, %v2425, %v2426
      %v2428 = vrot.slane %v1633, 2
      %v2429 = vsel %vm1834, %v2426, %v2428
      %v2430 = vrot.slane %v1634, 2
      %v2431 = vrot.slane %v1635, 2
      %v2432 = vsel %vm1834, %v2430, %v2431
      %v2433 = vrot.slane %v1636, 2
      %v2434 = vsel %vm1834, %v2431, %v2433
      %s2435 = scalar_lea.vmem %s2, 16
      %v2436 = vld [vmem:[%s2435] sm:$0x3f]
      %v2437 = vsel %vm1769, %v2357, 0
      %v2439 = vsel %vm1769, %v2359, 0
      %v2441 = vsel %vm1769, %v2362, 0
      %v2443 = vsel %vm1769, %v2364, 0
      %v2445 = vsel %vm1769, %v2367, 0
      %v2447 = vsel %vm1769, %v2369, 0
      %v2449 = vsel %vm1769, %v2372, 0
      %v2451 = vsel %vm1769, %v2374, 0
      %v2453 = vsel %vm1769, %v2377, 0
      %v2455 = vsel %vm1769, %v2379, 0
      %v2457 = vsel %vm1769, %v2382, 0
      %v2459 = vsel %vm1769, %v2384, 0
      %v2461 = vsel %vm1769, %v2387, 0
      %v2463 = vsel %vm1769, %v2389, 0
      %v2465 = vsel %vm1769, %v2392, 0
      %v2467 = vsel %vm1769, %v2394, 0
      %v2469 = vsel %vm1769, %v2397, 0
      %v2471 = vsel %vm1769, %v2399, 0
      %v2473 = vsel %vm1769, %v2402, 0
      %v2475 = vsel %vm1769, %v2404, 0
      %v2477 = vsel %vm1769, %v2407, 0
      %v2479 = vsel %vm1769, %v2409, 0
      %v2481 = vsel %vm1769, %v2412, 0
      %v2483 = vsel %vm1769, %v2414, 0
      %v2485 = vsel %vm1769, %v2417, 0
      %v2487 = vsel %vm1769, %v2419, 0
      %v2489 = vsel %vm1769, %v2422, 0
      %v2491 = vsel %vm1769, %v2424, 0
      %v2493 = vsel %vm1769, %v2427, 0
      %v2495 = vsel %vm1769, %v2429, 0
      %v2497 = vsel %vm1769, %v2432, 0
      %v2499 = vsel %vm1769, %v2434, 0
      %v2502 = vsel %vm1834, %v2436, 0
      %2504 = vmatprep.subr.mxu0 0.0
      %2505 = vmatpush1.msra.mxu0 0.0
      %2506 = vmatprep.subr.mxu0 0.0
      %2507 = vmatpush1.msra.mxu0 0.0
      %2508 = vmatprep.subr.mxu0 0.0
      %2509 = vmatpush1.msra.mxu0 0.0
      %2510 = vmatprep.subr.mxu0 0.0
      %2511 = vmatpush1.msra.mxu0 0.0
      %2512 = vmatprep.subr.mxu0 0.0
      %2513 = vmatpush1.msra.mxu0 0.0
      %2514 = vmatprep.subr.mxu0 0.0
      %2515 = vmatpush1.msra.mxu0 0.0
      %2516 = vmatprep.subr.mxu0 0.0
      %2517 = vmatpush1.msra.mxu0 0.0
      %2518 = vmatprep.subr.mxu0 0.0
      %2519 = vmatpush1.msra.mxu0 0.0
      %2520 = vmatprep.subr.mxu0 0.0
      %2521 = vmatpush1.msra.mxu0 0.0
      %2522 = vmatprep.subr.mxu0 0.0
      %2523 = vmatpush1.msra.mxu0 0.0
      %2524 = vmatprep.subr.mxu0 0.0
      %2525 = vmatpush1.msra.mxu0 0.0
      %2526 = vmatprep.subr.mxu0 0.0
      %2527 = vmatpush1.msra.mxu0 0.0
      %2528 = vmatprep.subr.mxu0 0.0
      %2529 = vmatpush1.msra.mxu0 0.0
      %2530 = vmatprep.subr.mxu0 0.0
      %2531 = vmatpush1.msra.mxu0 0.0
      %2532 = vmatprep.subr.mxu0 0.0
      %2533 = vmatpush1.msra.mxu0 0.0
      %2534 = vmatprep.subr.mxu0 0.0
      %2535 = vmatpush1.msra.mxu0 %v2502
      %2536 = vmatprep.subr.mxu0 0.0
      %2537 = vmatpush2.msra.mxu0 0.0
      %2538 = vmatprep.subr.mxu0 0.0
      %2539 = vmatpush2.msra.mxu0 0.0
      %2540 = vmatprep.subr.mxu0 0.0
      %2541 = vmatpush2.msra.mxu0 0.0
      %2542 = vmatprep.subr.mxu0 0.0
      %2543 = vmatpush2.msra.mxu0 0.0
      %2544 = vmatprep.subr.mxu0 0.0
      %2545 = vmatpush2.msra.mxu0 0.0
      %2546 = vmatprep.subr.mxu0 0.0
      %2547 = vmatpush2.msra.mxu0 0.0
      %2548 = vmatprep.subr.mxu0 0.0
      %2549 = vmatpush2.msra.mxu0 0.0
      %2550 = vmatprep.subr.mxu0 0.0
      %2551 = vmatpush2.msra.mxu0 0.0
      %2552 = vmatprep.subr.mxu0 0.0
      %2553 = vmatpush2.msra.mxu0 0.0
      %2554 = vmatprep.subr.mxu0 0.0
      %2555 = vmatpush2.msra.mxu0 0.0
      %2556 = vmatprep.subr.mxu0 0.0
      %2557 = vmatpush2.msra.mxu0 0.0
      %2558 = vmatprep.subr.mxu0 0.0
      %2559 = vmatpush2.msra.mxu0 0.0
      %2560 = vmatprep.subr.mxu0 0.0
      %2561 = vmatpush2.msra.mxu0 0.0
      %2562 = vmatprep.subr.mxu0 0.0
      %2563 = vmatpush2.msra.mxu0 0.0
      %2564 = vmatprep.subr.mxu0 0.0
      %2565 = vmatpush2.msra.mxu0 0.0
      %2566 = vmatprep.subr.mxu0 0.0
      %2567 = vmatpush2.msra.mxu0 0.0
      %2568 = vmatprep.mubr.f32.mxu0 0.0
      %2569 = vmatmul.mubr.f32.gmra.mxu0 %v2437
      %v2570 = vpop.f32.mrf.mxu0
      %v2571 = vadd.f32 0.0, %v2570
      %v2572 = vpop.f32.mrf.mxu0
      %2573 = vmatprep.mubr.f32.mxu0 0.0
      %2574 = vmatmul.mubr.f32.gmra.mxu0 %v2439
      %v2575 = vpop.f32.mrf.mxu0
      %v2576 = vadd.f32 0.0, %v2575
      %v2577 = vpop.f32.mrf.mxu0
      %2578 = vmatprep.mubr.f32.mxu0 0.0
      %2579 = vmatmul.mubr.f32.gmra.mxu0 %v2441
      %v2580 = vpop.f32.mrf.mxu0
      %v2581 = vadd.f32 0.0, %v2580
      %v2582 = vpop.f32.mrf.mxu0
      %2583 = vmatprep.mubr.f32.mxu0 0.0
      %2584 = vmatmul.mubr.f32.gmra.mxu0 %v2443
      %v2585 = vpop.f32.mrf.mxu0
      %v2586 = vadd.f32 0.0, %v2585
      %v2587 = vpop.f32.mrf.mxu0
      %2588 = vmatprep.mubr.f32.mxu0 0.0
      %2589 = vmatmul.mubr.f32.gmra.mxu0 %v2445
      %v2590 = vpop.f32.mrf.mxu0
      %v2591 = vadd.f32 0.0, %v2590
      %v2592 = vpop.f32.mrf.mxu0
      %2593 = vmatprep.mubr.f32.mxu0 0.0
      %2594 = vmatmul.mubr.f32.gmra.mxu0 %v2447
      %v2595 = vpop.f32.mrf.mxu0
      %v2596 = vadd.f32 0.0, %v2595
      %v2597 = vpop.f32.mrf.mxu0
      %2598 = vmatprep.mubr.f32.mxu0 0.0
      %2599 = vmatmul.mubr.f32.gmra.mxu0 %v2449
      %v2600 = vpop.f32.mrf.mxu0
      %v2601 = vadd.f32 0.0, %v2600
      %v2602 = vpop.f32.mrf.mxu0
      %2603 = vmatprep.mubr.f32.mxu0 0.0
      %2604 = vmatmul.mubr.f32.gmra.mxu0 %v2451
      %v2605 = vpop.f32.mrf.mxu0
      %v2606 = vadd.f32 0.0, %v2605
      %v2607 = vpop.f32.mrf.mxu0
      %2608 = vmatprep.mubr.f32.mxu0 0.0
      %2609 = vmatmul.mubr.f32.gmra.mxu0 %v2453
      %v2610 = vpop.f32.mrf.mxu0
      %v2611 = vadd.f32 0.0, %v2610
      %v2612 = vpop.f32.mrf.mxu0
      %2613 = vmatprep.mubr.f32.mxu0 0.0
      %2614 = vmatmul.mubr.f32.gmra.mxu0 %v2455
      %v2615 = vpop.f32.mrf.mxu0
      %v2616 = vadd.f32 0.0, %v2615
      %v2617 = vpop.f32.mrf.mxu0
      %2618 = vmatprep.mubr.f32.mxu0 0.0
      %2619 = vmatmul.mubr.f32.gmra.mxu0 %v2457
      %v2620 = vpop.f32.mrf.mxu0
      %v2621 = vadd.f32 0.0, %v2620
      %v2622 = vpop.f32.mrf.mxu0
      %2623 = vmatprep.mubr.f32.mxu0 0.0
      %2624 = vmatmul.mubr.f32.gmra.mxu0 %v2459
      %v2625 = vpop.f32.mrf.mxu0
      %v2626 = vadd.f32 0.0, %v2625
      %v2627 = vpop.f32.mrf.mxu0
      %2628 = vmatprep.mubr.f32.mxu0 0.0
      %2629 = vmatmul.mubr.f32.gmra.mxu0 %v2461
      %v2630 = vpop.f32.mrf.mxu0
      %v2631 = vadd.f32 0.0, %v2630
      %v2632 = vpop.f32.mrf.mxu0
      %2633 = vmatprep.mubr.f32.mxu0 0.0
      %2634 = vmatmul.mubr.f32.gmra.mxu0 %v2463
      %v2635 = vpop.f32.mrf.mxu0
      %v2636 = vadd.f32 0.0, %v2635
      %v2637 = vpop.f32.mrf.mxu0
      %2638 = vmatprep.mubr.f32.mxu0 0.0
      %2639 = vmatmul.mubr.f32.gmra.mxu0 %v2465
      %v2640 = vpop.f32.mrf.mxu0
      %v2641 = vadd.f32 0.0, %v2640
      %v2642 = vpop.f32.mrf.mxu0
      %2643 = vmatprep.mubr.f32.mxu0 0.0
      %2644 = vmatmul.mubr.f32.gmra.mxu0 %v2467
      %v2645 = vpop.f32.mrf.mxu0
      %v2646 = vadd.f32 0.0, %v2645
      %v2647 = vpop.f32.mrf.mxu0
      %2648 = vmatprep.mubr.f32.mxu0 0.0
      %2649 = vmatmul.mubr.f32.gmra.mxu0 %v2469
      %v2650 = vpop.f32.mrf.mxu0
      %v2651 = vadd.f32 0.0, %v2650
      %v2652 = vpop.f32.mrf.mxu0
      %2653 = vmatprep.mubr.f32.mxu0 0.0
      %2654 = vmatmul.mubr.f32.gmra.mxu0 %v2471
      %v2655 = vpop.f32.mrf.mxu0
      %v2656 = vadd.f32 0.0, %v2655
      %v2657 = vpop.f32.mrf.mxu0
      %2658 = vmatprep.mubr.f32.mxu0 0.0
      %2659 = vmatmul.mubr.f32.gmra.mxu0 %v2473
      %v2660 = vpop.f32.mrf.mxu0
      %v2661 = vadd.f32 0.0, %v2660
      %v2662 = vpop.f32.mrf.mxu0
      %2663 = vmatprep.mubr.f32.mxu0 0.0
      %2664 = vmatmul.mubr.f32.gmra.mxu0 %v2475
      %v2665 = vpop.f32.mrf.mxu0
      %v2666 = vadd.f32 0.0, %v2665
      %v2667 = vpop.f32.mrf.mxu0
      %2668 = vmatprep.mubr.f32.mxu0 0.0
      %2669 = vmatmul.mubr.f32.gmra.mxu0 %v2477
      %v2670 = vpop.f32.mrf.mxu0
      %v2671 = vadd.f32 0.0, %v2670
      %v2672 = vpop.f32.mrf.mxu0
      %2673 = vmatprep.mubr.f32.mxu0 0.0
      %2674 = vmatmul.mubr.f32.gmra.mxu0 %v2479
      %v2675 = vpop.f32.mrf.mxu0
      %v2676 = vadd.f32 0.0, %v2675
      %v2677 = vpop.f32.mrf.mxu0
      %2678 = vmatprep.mubr.f32.mxu0 0.0
      %2679 = vmatmul.mubr.f32.gmra.mxu0 %v2481
      %v2680 = vpop.f32.mrf.mxu0
      %v2681 = vadd.f32 0.0, %v2680
      %v2682 = vpop.f32.mrf.mxu0
      %2683 = vmatprep.mubr.f32.mxu0 0.0
      %2684 = vmatmul.mubr.f32.gmra.mxu0 %v2483
      %v2685 = vpop.f32.mrf.mxu0
      %v2686 = vadd.f32 0.0, %v2685
      %v2687 = vpop.f32.mrf.mxu0
      %2688 = vmatprep.mubr.f32.mxu0 0.0
      %2689 = vmatmul.mubr.f32.gmra.mxu0 %v2485
      %v2690 = vpop.f32.mrf.mxu0
      %v2691 = vadd.f32 0.0, %v2690
      %v2692 = vpop.f32.mrf.mxu0
      %2693 = vmatprep.mubr.f32.mxu0 0.0
      %2694 = vmatmul.mubr.f32.gmra.mxu0 %v2487
      %v2695 = vpop.f32.mrf.mxu0
      %v2696 = vadd.f32 0.0, %v2695
      %v2697 = vpop.f32.mrf.mxu0
      %2698 = vmatprep.mubr.f32.mxu0 0.0
      %2699 = vmatmul.mubr.f32.gmra.mxu0 %v2489
      %v2700 = vpop.f32.mrf.mxu0
      %v2701 = vadd.f32 0.0, %v2700
      %v2702 = vpop.f32.mrf.mxu0
      %2703 = vmatprep.mubr.f32.mxu0 0.0
      %2704 = vmatmul.mubr.f32.gmra.mxu0 %v2491
      %v2705 = vpop.f32.mrf.mxu0
      %v2706 = vadd.f32 0.0, %v2705
      %v2707 = vpop.f32.mrf.mxu0
      %2708 = vmatprep.mubr.f32.mxu0 0.0
      %2709 = vmatmul.mubr.f32.gmra.mxu0 %v2493
      %v2710 = vpop.f32.mrf.mxu0
      %v2711 = vadd.f32 0.0, %v2710
      %v2712 = vpop.f32.mrf.mxu0
      %2713 = vmatprep.mubr.f32.mxu0 0.0
      %2714 = vmatmul.mubr.f32.gmra.mxu0 %v2495
      %v2715 = vpop.f32.mrf.mxu0
      %v2716 = vadd.f32 0.0, %v2715
      %v2717 = vpop.f32.mrf.mxu0
      %2718 = vmatprep.mubr.f32.mxu0 0.0
      %2719 = vmatmul.mubr.f32.gmra.mxu0 %v2497
      %v2720 = vpop.f32.mrf.mxu0
      %v2721 = vadd.f32 0.0, %v2720
      %v2722 = vpop.f32.mrf.mxu0
      %2723 = vmatprep.mubr.f32.mxu0 0.0
      %2724 = vmatmul.mubr.f32.gmra.mxu0 %v2499
      %v2725 = vpop.f32.mrf.mxu0
      %v2726 = vadd.f32 0.0, %v2725
      %v2727 = vpop.f32.mrf.mxu0
      %2728 = vdwg.mxu0
      %v2729 = vadd.f32 %v2197, %v2571
      %v2730 = vadd.f32 %v2202, %v2576
      %v2731 = vadd.f32 %v2207, %v2581
      %v2732 = vadd.f32 %v2212, %v2586
      %v2733 = vadd.f32 %v2217, %v2591
      %v2734 = vadd.f32 %v2222, %v2596
      %v2735 = vadd.f32 %v2227, %v2601
      %v2736 = vadd.f32 %v2232, %v2606
      %v2737 = vadd.f32 %v2237, %v2611
      %v2738 = vadd.f32 %v2242, %v2616
      %v2739 = vadd.f32 %v2247, %v2621
      %v2740 = vadd.f32 %v2252, %v2626
      %v2741 = vadd.f32 %v2257, %v2631
      %v2742 = vadd.f32 %v2262, %v2636
      %v2743 = vadd.f32 %v2267, %v2641
      %v2744 = vadd.f32 %v2272, %v2646
      %v2745 = vadd.f32 %v2277, %v2651
      %v2746 = vadd.f32 %v2282, %v2656
      %v2747 = vadd.f32 %v2287, %v2661
      %v2748 = vadd.f32 %v2292, %v2666
      %v2749 = vadd.f32 %v2297, %v2671
      %v2750 = vadd.f32 %v2302, %v2676
      %v2751 = vadd.f32 %v2307, %v2681
      %v2752 = vadd.f32 %v2312, %v2686
      %v2753 = vadd.f32 %v2317, %v2691
      %v2754 = vadd.f32 %v2322, %v2696
      %v2755 = vadd.f32 %v2327, %v2701
      %v2756 = vadd.f32 %v2332, %v2706
      %v2757 = vadd.f32 %v2337, %v2711
      %v2758 = vadd.f32 %v2342, %v2716
      %v2759 = vadd.f32 %v2347, %v2721
      %v2760 = vadd.f32 %v2352, %v2726
      %v2761 = vld [vmem:[%s5] sm:$0x1]
      %v2763 = vlaneseq
      %v2764 = vshrl.u32 %v2763, 7
      %v2765 = vsub.s32 0, %v2764
      %v2766 = vrot.slane %v2761, %v2765
      %v2768 = vmul.f32 %v2729, %v2766
      %v2769 = vmul.f32 %v2730, %v2766
      %v2770 = vmul.f32 %v2731, %v2766
      %v2771 = vmul.f32 %v2732, %v2766
      %v2772 = vmul.f32 %v2733, %v2766
      %v2773 = vmul.f32 %v2734, %v2766
      %v2774 = vmul.f32 %v2735, %v2766
      %v2775 = vmul.f32 %v2736, %v2766
      %v2776 = vmul.f32 %v2737, %v2766
      %v2777 = vmul.f32 %v2738, %v2766
      %v2778 = vmul.f32 %v2739, %v2766
      %v2779 = vmul.f32 %v2740, %v2766
      %v2780 = vmul.f32 %v2741, %v2766
      %v2781 = vmul.f32 %v2742, %v2766
      %v2782 = vmul.f32 %v2743, %v2766
      %v2783 = vmul.f32 %v2744, %v2766
      %v2784 = vmul.f32 %v2745, %v2766
      %v2785 = vmul.f32 %v2746, %v2766
      %v2786 = vmul.f32 %v2747, %v2766
      %v2787 = vmul.f32 %v2748, %v2766
      %v2788 = vmul.f32 %v2749, %v2766
      %v2789 = vmul.f32 %v2750, %v2766
      %v2790 = vmul.f32 %v2751, %v2766
      %v2791 = vmul.f32 %v2752, %v2766
      %v2792 = vmul.f32 %v2753, %v2766
      %v2793 = vmul.f32 %v2754, %v2766
      %v2794 = vmul.f32 %v2755, %v2766
      %v2795 = vmul.f32 %v2756, %v2766
      %v2796 = vmul.f32 %v2757, %v2766
      %v2797 = vmul.f32 %v2758, %v2766
      %v2798 = vmul.f32 %v2759, %v2766
      %v2799 = vmul.f32 %v2760, %v2766
      %v2800 = vld [vmem:[%s6] sm:$0x1]
      %v2802 = vlaneseq
      %v2803 = vshrl.u32 %v2802, 7
      %v2804 = vsub.s32 0, %v2803
      %v2805 = vrot.slane %v2800, %v2804
      %v2807 = vadd.f32 %v2768, %v2805
      %v2808 = vadd.f32 %v2769, %v2805
      %v2809 = vadd.f32 %v2770, %v2805
      %v2810 = vadd.f32 %v2771, %v2805
      %v2811 = vadd.f32 %v2772, %v2805
      %v2812 = vadd.f32 %v2773, %v2805
      %v2813 = vadd.f32 %v2774, %v2805
      %v2814 = vadd.f32 %v2775, %v2805
      %v2815 = vadd.f32 %v2776, %v2805
      %v2816 = vadd.f32 %v2777, %v2805
      %v2817 = vadd.f32 %v2778, %v2805
      %v2818 = vadd.f32 %v2779, %v2805
      %v2819 = vadd.f32 %v2780, %v2805
      %v2820 = vadd.f32 %v2781, %v2805
      %v2821 = vadd.f32 %v2782, %v2805
      %v2822 = vadd.f32 %v2783, %v2805
      %v2823 = vadd.f32 %v2784, %v2805
      %v2824 = vadd.f32 %v2785, %v2805
      %v2825 = vadd.f32 %v2786, %v2805
      %v2826 = vadd.f32 %v2787, %v2805
      %v2827 = vadd.f32 %v2788, %v2805
      %v2828 = vadd.f32 %v2789, %v2805
      %v2829 = vadd.f32 %v2790, %v2805
      %v2830 = vadd.f32 %v2791, %v2805
      %v2831 = vadd.f32 %v2792, %v2805
      %v2832 = vadd.f32 %v2793, %v2805
      %v2833 = vadd.f32 %v2794, %v2805
      %v2834 = vadd.f32 %v2795, %v2805
      %v2835 = vadd.f32 %v2796, %v2805
      %v2836 = vadd.f32 %v2797, %v2805
      %v2837 = vadd.f32 %v2798, %v2805
      %v2838 = vadd.f32 %v2799, %v2805
      %v2839 = vsub.f32 0.0, %v2807
      %v2840 = vsub.f32 0.0, %v2808
      %v2841 = vsub.f32 0.0, %v2809
      %v2842 = vsub.f32 0.0, %v2810
      %v2843 = vsub.f32 0.0, %v2811
      %v2844 = vsub.f32 0.0, %v2812
      %v2845 = vsub.f32 0.0, %v2813
      %v2846 = vsub.f32 0.0, %v2814
      %v2847 = vsub.f32 0.0, %v2815
      %v2848 = vsub.f32 0.0, %v2816
      %v2849 = vsub.f32 0.0, %v2817
      %v2850 = vsub.f32 0.0, %v2818
      %v2851 = vsub.f32 0.0, %v2819
      %v2852 = vsub.f32 0.0, %v2820
      %v2853 = vsub.f32 0.0, %v2821
      %v2854 = vsub.f32 0.0, %v2822
      %v2855 = vsub.f32 0.0, %v2823
      %v2856 = vsub.f32 0.0, %v2824
      %v2857 = vsub.f32 0.0, %v2825
      %v2858 = vsub.f32 0.0, %v2826
      %v2859 = vsub.f32 0.0, %v2827
      %v2860 = vsub.f32 0.0, %v2828
      %v2861 = vsub.f32 0.0, %v2829
      %v2862 = vsub.f32 0.0, %v2830
      %v2863 = vsub.f32 0.0, %v2831
      %v2864 = vsub.f32 0.0, %v2832
      %v2865 = vsub.f32 0.0, %v2833
      %v2866 = vsub.f32 0.0, %v2834
      %v2867 = vsub.f32 0.0, %v2835
      %v2868 = vsub.f32 0.0, %v2836
      %v2869 = vsub.f32 0.0, %v2837
      %v2870 = vsub.f32 0.0, %v2838
      %v2871 = vmul.f32 %v2839, 1.442695
      %v2872 = vpow.pop %v2871
      %v2873 = vmul.f32 %v2840, 1.442695
      %v2874 = vpow.pop %v2873
      %v2875 = vmul.f32 %v2841, 1.442695
      %v2876 = vpow.pop %v2875
      %v2877 = vmul.f32 %v2842, 1.442695
      %v2878 = vpow.pop %v2877
      %v2879 = vmul.f32 %v2843, 1.442695
      %v2880 = vpow.pop %v2879
      %v2881 = vmul.f32 %v2844, 1.442695
      %v2882 = vpow.pop %v2881
      %v2883 = vmul.f32 %v2845, 1.442695
      %v2884 = vpow.pop %v2883
      %v2885 = vmul.f32 %v2846, 1.442695
      %v2886 = vpow.pop %v2885
      %v2887 = vmul.f32 %v2847, 1.442695
      %v2888 = vpow.pop %v2887
      %v2889 = vmul.f32 %v2848, 1.442695
      %v2890 = vpow.pop %v2889
      %v2891 = vmul.f32 %v2849, 1.442695
      %v2892 = vpow.pop %v2891
      %v2893 = vmul.f32 %v2850, 1.442695
      %v2894 = vpow.pop %v2893
      %v2895 = vmul.f32 %v2851, 1.442695
      %v2896 = vpow.pop %v2895
      %v2897 = vmul.f32 %v2852, 1.442695
      %v2898 = vpow.pop %v2897
      %v2899 = vmul.f32 %v2853, 1.442695
      %v2900 = vpow.pop %v2899
      %v2901 = vmul.f32 %v2854, 1.442695
      %v2902 = vpow.pop %v2901
      %v2903 = vmul.f32 %v2855, 1.442695
      %v2904 = vpow.pop %v2903
      %v2905 = vmul.f32 %v2856, 1.442695
      %v2906 = vpow.pop %v2905
      %v2907 = vmul.f32 %v2857, 1.442695
      %v2908 = vpow.pop %v2907
      %v2909 = vmul.f32 %v2858, 1.442695
      %v2910 = vpow.pop %v2909
      %v2911 = vmul.f32 %v2859, 1.442695
      %v2912 = vpow.pop %v2911
      %v2913 = vmul.f32 %v2860, 1.442695
      %v2914 = vpow.pop %v2913
      %v2915 = vmul.f32 %v2861, 1.442695
      %v2916 = vpow.pop %v2915
      %v2917 = vmul.f32 %v2862, 1.442695
      %v2918 = vpow.pop %v2917
      %v2919 = vmul.f32 %v2863, 1.442695
      %v2920 = vpow.pop %v2919
      %v2921 = vmul.f32 %v2864, 1.442695
      %v2922 = vpow.pop %v2921
      %v2923 = vmul.f32 %v2865, 1.442695
      %v2924 = vpow.pop %v2923
      %v2925 = vmul.f32 %v2866, 1.442695
      %v2926 = vpow.pop %v2925
      %v2927 = vmul.f32 %v2867, 1.442695
      %v2928 = vpow.pop %v2927
      %v2929 = vmul.f32 %v2868, 1.442695
      %v2930 = vpow.pop %v2929
      %v2931 = vmul.f32 %v2869, 1.442695
      %v2932 = vpow.pop %v2931
      %v2933 = vmul.f32 %v2870, 1.442695
      %v2934 = vpow.pop %v2933
      %v2935 = vadd.f32 %v2872, 1.0
      %v2936 = vadd.f32 %v2874, 1.0
      %v2937 = vadd.f32 %v2876, 1.0
      %v2938 = vadd.f32 %v2878, 1.0
      %v2939 = vadd.f32 %v2880, 1.0
      %v2940 = vadd.f32 %v2882, 1.0
      %v2941 = vadd.f32 %v2884, 1.0
      %v2942 = vadd.f32 %v2886, 1.0
      %v2943 = vadd.f32 %v2888, 1.0
      %v2944 = vadd.f32 %v2890, 1.0
      %v2945 = vadd.f32 %v2892, 1.0
      %v2946 = vadd.f32 %v2894, 1.0
      %v2947 = vadd.f32 %v2896, 1.0
      %v2948 = vadd.f32 %v2898, 1.0
      %v2949 = vadd.f32 %v2900, 1.0
      %v2950 = vadd.f32 %v2902, 1.0
      %v2951 = vadd.f32 %v2904, 1.0
      %v2952 = vadd.f32 %v2906, 1.0
      %v2953 = vadd.f32 %v2908, 1.0
      %v2954 = vadd.f32 %v2910, 1.0
      %v2955 = vadd.f32 %v2912, 1.0
      %v2956 = vadd.f32 %v2914, 1.0
      %v2957 = vadd.f32 %v2916, 1.0
      %v2958 = vadd.f32 %v2918, 1.0
      %v2959 = vadd.f32 %v2920, 1.0
      %v2960 = vadd.f32 %v2922, 1.0
      %v2961 = vadd.f32 %v2924, 1.0
      %v2962 = vadd.f32 %v2926, 1.0
      %v2963 = vadd.f32 %v2928, 1.0
      %v2964 = vadd.f32 %v2930, 1.0
      %v2965 = vadd.f32 %v2932, 1.0
      %v2966 = vadd.f32 %v2934, 1.0
      %v2967 = vrcp.pop %v2935
      %v2968 = vrcp.pop %v2936
      %v2969 = vrcp.pop %v2937
      %v2970 = vrcp.pop %v2938
      %v2971 = vrcp.pop %v2939
      %v2972 = vrcp.pop %v2940
      %v2973 = vrcp.pop %v2941
      %v2974 = vrcp.pop %v2942
      %v2975 = vrcp.pop %v2943
      %v2976 = vrcp.pop %v2944
      %v2977 = vrcp.pop %v2945
      %v2978 = vrcp.pop %v2946
      %v2979 = vrcp.pop %v2947
      %v2980 = vrcp.pop %v2948
      %v2981 = vrcp.pop %v2949
      %v2982 = vrcp.pop %v2950
      %v2983 = vrcp.pop %v2951
      %v2984 = vrcp.pop %v2952
      %v2985 = vrcp.pop %v2953
      %v2986 = vrcp.pop %v2954
      %v2987 = vrcp.pop %v2955
      %v2988 = vrcp.pop %v2956
      %v2989 = vrcp.pop %v2957
      %v2990 = vrcp.pop %v2958
      %v2991 = vrcp.pop %v2959
      %v2992 = vrcp.pop %v2960
      %v2993 = vrcp.pop %v2961
      %v2994 = vrcp.pop %v2962
      %v2995 = vrcp.pop %v2963
      %v2996 = vrcp.pop %v2964
      %v2997 = vrcp.pop %v2965
      %v2998 = vrcp.pop %v2966
      %v2999 = vmul.f32 %v2807, %v2967
      %v3000 = vmul.f32 %v2808, %v2968
      %v3001 = vmul.f32 %v2809, %v2969
      %v3002 = vmul.f32 %v2810, %v2970
      %v3003 = vmul.f32 %v2811, %v2971
      %v3004 = vmul.f32 %v2812, %v2972
      %v3005 = vmul.f32 %v2813, %v2973
      %v3006 = vmul.f32 %v2814, %v2974
      %v3007 = vmul.f32 %v2815, %v2975
      %v3008 = vmul.f32 %v2816, %v2976
      %v3009 = vmul.f32 %v2817, %v2977
      %v3010 = vmul.f32 %v2818, %v2978
      %v3011 = vmul.f32 %v2819, %v2979
      %v3012 = vmul.f32 %v2820, %v2980
      %v3013 = vmul.f32 %v2821, %v2981
      %v3014 = vmul.f32 %v2822, %v2982
      %v3015 = vmul.f32 %v2823, %v2983
      %v3016 = vmul.f32 %v2824, %v2984
      %v3017 = vmul.f32 %v2825, %v2985
      %v3018 = vmul.f32 %v2826, %v2986
      %v3019 = vmul.f32 %v2827, %v2987
      %v3020 = vmul.f32 %v2828, %v2988
      %v3021 = vmul.f32 %v2829, %v2989
      %v3022 = vmul.f32 %v2830, %v2990
      %v3023 = vmul.f32 %v2831, %v2991
      %v3024 = vmul.f32 %v2832, %v2992
      %v3025 = vmul.f32 %v2833, %v2993
      %v3026 = vmul.f32 %v2834, %v2994
      %v3027 = vmul.f32 %v2835, %v2995
      %v3028 = vmul.f32 %v2836, %v2996
      %v3029 = vmul.f32 %v2837, %v2997
      %v3030 = vmul.f32 %v2838, %v2998
      %v3031 = vadd.f32 %v2999, %v304
      %v3032 = vadd.f32 %v3000, %v305
      %v3033 = vadd.f32 %v3001, %v306
      %v3034 = vadd.f32 %v3002, %v307
      %v3035 = vadd.f32 %v3003, %v308
      %v3036 = vadd.f32 %v3004, %v309
      %v3037 = vadd.f32 %v3005, %v310
      %v3038 = vadd.f32 %v3006, %v311
      %v3039 = vadd.f32 %v3007, %v312
      %v3040 = vadd.f32 %v3008, %v313
      %v3041 = vadd.f32 %v3009, %v314
      %v3042 = vadd.f32 %v3010, %v315
      %v3043 = vadd.f32 %v3011, %v316
      %v3044 = vadd.f32 %v3012, %v317
      %v3045 = vadd.f32 %v3013, %v318
      %v3046 = vadd.f32 %v3014, %v319
      %v3047 = vadd.f32 %v3015, %v320
      %v3048 = vadd.f32 %v3016, %v321
      %v3049 = vadd.f32 %v3017, %v322
      %v3050 = vadd.f32 %v3018, %v323
      %v3051 = vadd.f32 %v3019, %v324
      %v3052 = vadd.f32 %v3020, %v325
      %v3053 = vadd.f32 %v3021, %v326
      %v3054 = vadd.f32 %v3022, %v327
      %v3055 = vadd.f32 %v3023, %v328
      %v3056 = vadd.f32 %v3024, %v329
      %v3057 = vadd.f32 %v3025, %v330
      %v3058 = vadd.f32 %v3026, %v331
      %v3059 = vadd.f32 %v3027, %v332
      %v3060 = vadd.f32 %v3028, %v333
      %v3061 = vadd.f32 %v3029, %v334
      %v3062 = vadd.f32 %v3030, %v335
      %3063 = vst.msk [vmem:[%s300] sm:$0xff] %vm337, %v3031
      %3064 = vst.msk [vmem:[%s300 + $0x8] sm:$0xff] %vm337, %v3032
      %3065 = vst.msk [vmem:[%s300 + $0x10] sm:$0xff] %vm337, %v3033
      %3066 = vst.msk [vmem:[%s300 + $0x18] sm:$0xff] %vm337, %v3034
      %3067 = vst.msk [vmem:[%s300 + $0x20] sm:$0xff] %vm337, %v3035
      %3068 = vst.msk [vmem:[%s300 + $0x28] sm:$0xff] %vm337, %v3036
      %3069 = vst.msk [vmem:[%s300 + $0x30] sm:$0xff] %vm337, %v3037
      %3070 = vst.msk [vmem:[%s300 + $0x38] sm:$0xff] %vm337, %v3038
      %3071 = vst.msk [vmem:[%s300 + $0x40] sm:$0xff] %vm337, %v3039
      %3072 = vst.msk [vmem:[%s300 + $0x48] sm:$0xff] %vm337, %v3040
      %3073 = vst.msk [vmem:[%s300 + $0x50] sm:$0xff] %vm337, %v3041
      %3074 = vst.msk [vmem:[%s300 + $0x58] sm:$0xff] %vm337, %v3042
      %3075 = vst.msk [vmem:[%s300 + $0x60] sm:$0xff] %vm337, %v3043
      %3076 = vst.msk [vmem:[%s300 + $0x68] sm:$0xff] %vm337, %v3044
      %3077 = vst.msk [vmem:[%s300 + $0x70] sm:$0xff] %vm337, %v3045
      %3078 = vst.msk [vmem:[%s300 + $0x78] sm:$0xff] %vm337, %v3046
      %3079 = vst.msk [vmem:[%s300 + $0x80] sm:$0xff] %vm337, %v3047
      %3080 = vst.msk [vmem:[%s300 + $0x88] sm:$0xff] %vm337, %v3048
      %3081 = vst.msk [vmem:[%s300 + $0x90] sm:$0xff] %vm337, %v3049
      %3082 = vst.msk [vmem:[%s300 + $0x98] sm:$0xff] %vm337, %v3050
      %3083 = vst.msk [vmem:[%s300 + $0xa0] sm:$0xff] %vm337, %v3051
      %3084 = vst.msk [vmem:[%s300 + $0xa8] sm:$0xff] %vm337, %v3052
      %3085 = vst.msk [vmem:[%s300 + $0xb0] sm:$0xff] %vm337, %v3053
      %3086 = vst.msk [vmem:[%s300 + $0xb8] sm:$0xff] %vm337, %v3054
      %3087 = vst.msk [vmem:[%s300 + $0xc0] sm:$0xff] %vm337, %v3055
      %3088 = vst.msk [vmem:[%s300 + $0xc8] sm:$0xff] %vm337, %v3056
      %3089 = vst.msk [vmem:[%s300 + $0xd0] sm:$0xff] %vm337, %v3057
      %3090 = vst.msk [vmem:[%s300 + $0xd8] sm:$0xff] %vm337, %v3058
      %3091 = vst.msk [vmem:[%s300 + $0xe0] sm:$0xff] %vm337, %v3059
      %3092 = vst.msk [vmem:[%s300 + $0xe8] sm:$0xff] %vm337, %v3060
      %3093 = vst.msk [vmem:[%s300 + $0xf0] sm:$0xff] %vm337, %v3061
      %3094 = vst.msk [vmem:[%s300 + $0xf8] sm:$0xff] %vm337, %v3062
      %s3095 = smul.u32 32, %s23
      %p3096 = scmp.lt.s32.totalorder %s22, 1
      %s3097 = scalar_select %p3096, %s22, 1
      %p3098 = scmp.lt.s32.totalorder %s3095, 31
      %s3099 = scalar_select %p3098, %s3095, 31
      %s3100 = smul.addr %s3097, 32
      %s3101 = sadd.s32 %s3099, %s3100
      %s3102 = smul.addr %s3101, 8
      %s3103 = scalar_lea.vmem %s7, %s3102
      // Predicated region
      $region49: #{bottleneck_base.1} parent=47 // pred_check
        %p3104 = pneg %p202
      $region50: #{bottleneck_base.1} parent=47 // pred_check_branch
        %3106 = sbr.rel (%p3104) target = $region52
      $region51: #{bottleneck_base.1} parent=47 // pred_region
        %s3107 = smul.u32 32, %s23
      $region52: #{bottleneck_base.1} parent=47 // pred_fallthru
        _
    $region48: #{bottleneck_base.1} parent=5 // pred_fallthru
      _
    %p3108 = scmp.le.s32.totalorder 2, %s13
    // Predicated region
    $region53: #{bottleneck_base.1} parent=5 // pred_check
      %p3109 = pneg %p3108
    $region54: #{bottleneck_base.1} parent=5 // pred_check_branch
      %3111 = sbr.rel (%p3109) target = $region56
    $region55: #{bottleneck_base.1} parent=5 // pred_region
      %s3112 = ssub.s32 %s13, 2
      // Predicated region
      $region57: #{bottleneck_base.1} parent=55 // pred_check
        %p3113 = pneg %p208
      $region58: #{bottleneck_base.1} parent=55 // pred_check_branch
        %3115 = sbr.rel (%p3113) target = $region60
      $region59: #{bottleneck_base.1} parent=55 // pred_region
        %s3116 = smul.u32 32, %s25
        %p3117 = scmp.lt.s32.totalorder %s24, 1
        %s3118 = scalar_select %p3117, %s24, 1
        %p3119 = scmp.lt.s32.totalorder %s3116, 31
        %s3120 = scalar_select %p3119, %s3116, 31
        %s3121 = smul.addr %s3118, 32
        %s3122 = sadd.s32 %s3120, %s3121
        %s3123 = smul.addr %s3122, 8
        %s3124 = scalar_lea.vmem %s7, %s3123
      $region60: #{bottleneck_base.1} parent=55 // pred_fallthru
        _
    $region56: #{bottleneck_base.1} parent=5 // pred_fallthru
      _
  $region6: #{bottleneck_base.1} parent=0 // loop_footer
    %s17 = sadd.s32 1, %s13
  $region7: #{bottleneck_base.1} parent=0 // loop_footer_branch
    %12 = sbr.rel target = $region3
  $region8: #{bottleneck_base.1} parent=0 // loop_exit
    _

</llo_original>
